<compile_context>
chip_gen: v7x
topology: tpu7x:2x2x1
jax: 0.10.0
libtpu: 0.0.40
codegen_flags: <defaults>
</compile_context>

<pallas_src>
import functools

import jax
import jax.numpy as jnp
from jax import lax
from jax.experimental import pallas as pl
from jax.experimental.pallas import tpu as pltpu


def _conv_kernel(x_ref, w_ref, b_ref, o_ref, patch_ref, *, ksize, tile_oh,
                 ow_pad, channels):
    """One (batch, oh-tile) step of the convolution.

    x_ref     : (H_pad, W_pad, C) bf16   full (padded) image of this batch element
    w_ref     : (K*K*C, Cp)       bf16   pre-masked weight, (kh,kw,c)-major rows
    b_ref     : (1, Cp)           f32    bias (zero in padded output channels)
    o_ref     : (tile_oh*OW_pad, Cp) bf16 output tile (lane-dense, Cp % 128 == 0)
    patch_ref : (tile_oh*OW_pad, K*K*C) bf16 VMEM scratch (in-kernel im2col)
    """
    t = pl.program_id(1)
    r0 = pl.multiple_of(t * tile_oh, tile_oh)
    tile_m = tile_oh * ow_pad

    # In-VMEM im2col: slice x_ref directly per (kh, kw) tap and lay the slices
    # side by side along the lane axis of the patch scratch.  All K*K*C columns
    # are written every step, so no zero-init is needed.
    for kh in range(ksize):
        for kw in range(ksize):
            idx = kh * ksize + kw
            piece = x_ref[pl.ds(r0 + kh, tile_oh), pl.ds(kw, ow_pad), :]
            patch_ref[:, idx * channels:(idx + 1) * channels] = (
                piece.reshape(tile_m, channels))

    # Single deep-contraction MXU dot, f32 accumulation, bias folded in, bf16 store.
    acc = jnp.dot(patch_ref[...], w_ref[...], preferred_element_type=jnp.float32)
    o_ref[...] = (acc + b_ref[...]).astype(o_ref.dtype)


def channel_group_conv_uneven(x, weight, bias, param, *, cout, kernel_size,
                              target_tile_m=2048):
    """x: (N, C, H, W) f32; weight: (cout*ngroup, C, K, K); bias: (cout*ngroup,);
    param: (ngroup,) int32. Returns (N, cout*ngroup, H-K+1, W-K+1) f32 (NCHW)."""
    N, C, H, W = x.shape
    K = kernel_size
    CoutT = weight.shape[0]
    OH, OW = H - K + 1, W - K + 1

    # ---- tiling / padding parameters ----
    Cp = -(-CoutT // 128) * 128                 # output channels padded to lane multiple
    OW_pad = -(-OW // 8) * 8                    # output width padded to sublane multiple
    tile_oh = max(1, min(OH, target_tile_m // OW_pad))
    # TODO(synk): if OW_pad > target_tile_m, tile_m collapses to one OW_pad row
    # and is effectively unbounded; width tiling would be needed for such inputs.
    n_tiles = -(-OH // tile_oh)
    OH_pad = n_tiles * tile_oh
    H_pad = OH_pad + K - 1
    W_pad = OW_pad + K - 1
    tile_m = tile_oh * OW_pad                   # always a multiple of 8
    KKC = K * K * C                             # folded contraction depth

    # ---- ChannelGroupParamOp.forward_uneven: mask weight (tiny, trace-time) ----
    thr = jnp.repeat(param.astype(jnp.int32), cout)                       # (CoutT,)
    keep = (jnp.arange(C, dtype=jnp.int32)[None, :] >= thr[:, None])      # (CoutT, C)
    w_masked = weight.astype(jnp.float32) * keep.astype(jnp.float32)[:, :, None, None]
    # (CoutT, C, K, K) -> (K, K, C, CoutT) -> (K*K*C, CoutT) -> pad -> bf16
    w_kk = jnp.transpose(w_masked, (2, 3, 1, 0)).reshape(KKC, CoutT)
    w_kk = jnp.pad(w_kk, ((0, 0), (0, Cp - CoutT))).astype(jnp.bfloat16)
    b2 = jnp.pad(bias.astype(jnp.float32), (0, Cp - CoutT)).reshape(1, Cp)

    # ---- glue: bf16 FIRST, then NCHW -> NHWC + small zero pad of H/W ----
    x_bf = x.astype(jnp.bfloat16)
    x_nhwc = jnp.transpose(x_bf, (0, 2, 3, 1))
    x_p = jnp.pad(x_nhwc, ((0, 0), (0, H_pad - H), (0, W_pad - W), (0, 0)))

    M_out = N * n_tiles * tile_m

    # ---- VMEM budget: double-buffered blocks + patch scratch + headroom ----
    img_b = H_pad * W_pad * C * 2
    w_b = KKC * Cp * 2
    b_b = Cp * 4
    out_b = tile_m * Cp * 2
    patch_b = tile_m * KKC * 2
    need = 2 * (img_b + w_b + b_b + out_b) + patch_b + (2 << 20)
    vmem_limit = int(min(max(need, 32 << 20), 48 << 20))   # safe ceiling on v5e/v6e/v7x

    kernel = functools.partial(_conv_kernel, ksize=K, tile_oh=tile_oh,
                               ow_pad=OW_pad, channels=C)

    out_flat = pl.pallas_call(
        kernel,
        out_shape=jax.ShapeDtypeStruct((M_out, Cp), jnp.bfloat16),
        grid_spec=pltpu.PrefetchScalarGridSpec(
            num_scalar_prefetch=0,
            grid=(N, n_tiles),
            in_specs=[
                # whole padded image per batch element (revisited across oh-tiles)
                pl.BlockSpec((None, H_pad, W_pad, C), lambda n, t: (n, 0, 0, 0)),
                pl.BlockSpec((KKC, Cp), lambda n, t: (0, 0)),   # weights (broadcast)
                pl.BlockSpec((1, Cp), lambda n, t: (0, 0)),     # bias (broadcast)
            ],
            out_specs=pl.BlockSpec((tile_m, Cp),
                                   lambda n, t: (n * n_tiles + t, 0)),
            scratch_shapes=[pltpu.VMEM((tile_m, KKC), jnp.bfloat16)],
        ),
        compiler_params=pltpu.CompilerParams(
            dimension_semantics=("parallel", "arbitrary"),
            vmem_limit_bytes=vmem_limit),
        cost_estimate=pl.CostEstimate(
            flops=2 * N * OH * OW * KKC * CoutT,
            transcendentals=0,
            bytes_accessed=x_p.size * 2 + w_kk.size * 2 + b2.size * 4 + M_out * Cp * 2),
    )(x_p, w_kk, b2)

    # strip padded rows / cols / channels, back to NCHW, restore f32 output dtype
    out = out_flat.reshape(N, OH_pad, OW_pad, Cp)[:, :OH, :OW, :CoutT]
    return jnp.transpose(out, (0, 3, 1, 2)).astype(jnp.float32)


if __name__ == "__main__":
    # Small shapes consistent with the module: mode=0 -> ngroup=5.
    N, C, H, W = 2, 8, 16, 16
    cout, K, mode = 4, 3, 0
    ngroup = 5
    CoutT = cout * ngroup

    key = jax.random.PRNGKey(0)
    k_x, k_w = jax.random.split(key)

    x = jax.random.normal(k_x, (N, C, H, W), dtype=jnp.float32)

    # weight ~ kaiming_uniform_ (a=0 -> bound = sqrt(6 / fan_in)), deterministic
    fan_in = C * K * K
    bound = (6.0 / fan_in) ** 0.5
    weight = jax.random.uniform(k_w, (CoutT, C, K, K), jnp.float32, -bound, bound)
    bias = jnp.zeros((CoutT,), jnp.float32)     # nn.Parameter(torch.zeros(...))

    # param buffer: floor(pm * channels + 0.5), mode 0 schedule
    pm = jnp.array([0.0, 0.05, 0.1, 0.2, 0.4], jnp.float32)
    param = jnp.floor(pm * C + 0.5).astype(jnp.int32)

    out = channel_group_conv_uneven(x, weight, bias, param, cout=cout, kernel_size=K)
    out = jax.block_until_ready(out)

    # pure-JAX reference (same masking assumption) on bf16-rounded operands so
    # the only differences vs the kernel are f32 accumulation order and the
    # kernel's bf16 output store.
    thr = jnp.repeat(param, cout)
    keep = (jnp.arange(C)[None, :] >= thr[:, None]).astype(jnp.float32)
    w_masked = weight * keep[:, :, None, None]
    x_r = x.astype(jnp.bfloat16).astype(jnp.float32)
    w_r = w_masked.astype(jnp.bfloat16).astype(jnp.float32)
    ref = lax.conv_general_dilated(
        x_r, w_r, window_strides=(1, 1), padding="VALID",
        dimension_numbers=("NCHW", "OIHW", "NCHW"),
        precision=lax.Precision.HIGHEST,
    ) + bias[None, :, None, None]

    assert out.shape == (N, CoutT, H - K + 1, W - K + 1), out.shape
    err = float(jnp.max(jnp.abs(out - ref)))
    assert jnp.allclose(out, ref, atol=2e-2, rtol=2e-2), err
    print("KERNEL_OK")
</pallas_src>

<mosaic_0001>
module attributes {stable_mosaic.version = 11 : i64} {
  func.func @_conv_kernel(%arg0: i32, %arg1: i32, %arg2: memref<1x16x18x8xbf16, #tpu.memory_space<vmem>>, %arg3: memref<72x128xbf16, #tpu.memory_space<vmem>>, %arg4: memref<1x128xf32, #tpu.memory_space<vmem>>, %arg5: memref<224x128xbf16, #tpu.memory_space<vmem>>, %arg6: memref<224x72xbf16, #tpu.memory_space<vmem>>) attributes {dimension_semantics = [#tpu.dimension_semantics<parallel>, #tpu.dimension_semantics<arbitrary>], iteration_bounds = array<i64: 2, 1>, scalar_prefetch = 0 : i64, scratch_operands = 1 : i64, tpu.core_type = #tpu.core_type<tc>, window_params = [{transform_indices = @transform_0, window_bounds = array<i64: 1, 16, 18, 8>}, {pipeline_mode = #tpu.pipeline_mode<synchronous>, transform_indices = @transform_1, window_bounds = array<i64: 72, 128>}, {pipeline_mode = #tpu.pipeline_mode<synchronous>, transform_indices = @transform_2, window_bounds = array<i64: 1, 128>}, {transform_indices = @transform_3, window_bounds = array<i64: 224, 128>}]} {
    %c14_i32 = arith.constant 14 : i32
    %0 = arith.muli %arg1, %c14_i32 : i32
    %1 = tpu.assume_multiple %0, 14 : i32
    %c0_i32 = arith.constant 0 : i32
    %2 = arith.addi %1, %c0_i32 : i32
    %c0 = arith.constant 0 : index
    %3 = arith.index_cast %2 : i32 to index
    %c0_0 = arith.constant 0 : index
    %c0_1 = arith.constant 0 : index
    %4 = vector.load %arg2[%c0, %3, %c0_0, %c0_1] : memref<1x16x18x8xbf16, #tpu.memory_space<vmem>>, vector<1x14x16x8xbf16>
    %5 = vector.shape_cast %4 : vector<1x14x16x8xbf16> to vector<14x16x8xbf16>
    %6 = vector.shape_cast %5 : vector<14x16x8xbf16> to vector<224x8xbf16>
    %c0_2 = arith.constant 0 : index
    %c0_3 = arith.constant 0 : index
    %7 = vector.load %arg6[%c0_2, %c0_3] : memref<224x72xbf16, #tpu.memory_space<vmem>>, vector<224x8xbf16>
    tpu.vector_store %arg6[%c0_2, %c0_3], %6 {strides = array<i32>} : memref<224x72xbf16, #tpu.memory_space<vmem>>, vector<224x8xbf16>,
    %c0_i32_4 = arith.constant 0 : i32
    %8 = arith.addi %1, %c0_i32_4 : i32
    %c0_5 = arith.constant 0 : index
    %9 = arith.index_cast %8 : i32 to index
    %c1 = arith.constant 1 : index
    %c0_6 = arith.constant 0 : index
    %10 = vector.load %arg2[%c0_5, %9, %c1, %c0_6] : memref<1x16x18x8xbf16, #tpu.memory_space<vmem>>, vector<1x14x16x8xbf16>
    %11 = vector.shape_cast %10 : vector<1x14x16x8xbf16> to vector<14x16x8xbf16>
    %12 = vector.shape_cast %11 : vector<14x16x8xbf16> to vector<224x8xbf16>
    %c0_7 = arith.constant 0 : index
    %c8 = arith.constant 8 : index
    %13 = vector.load %arg6[%c0_7, %c8] : memref<224x72xbf16, #tpu.memory_space<vmem>>, vector<224x8xbf16>
    tpu.vector_store %arg6[%c0_7, %c8], %12 {strides = array<i32>} : memref<224x72xbf16, #tpu.memory_space<vmem>>, vector<224x8xbf16>,
    %c0_i32_8 = arith.constant 0 : i32
    %14 = arith.addi %1, %c0_i32_8 : i32
    %c0_9 = arith.constant 0 : index
    %15 = arith.index_cast %14 : i32 to index
    %c2 = arith.constant 2 : index
    %c0_10 = arith.constant 0 : index
    %16 = vector.load %arg2[%c0_9, %15, %c2, %c0_10] : memref<1x16x18x8xbf16, #tpu.memory_space<vmem>>, vector<1x14x16x8xbf16>
    %17 = vector.shape_cast %16 : vector<1x14x16x8xbf16> to vector<14x16x8xbf16>
    %18 = vector.shape_cast %17 : vector<14x16x8xbf16> to vector<224x8xbf16>
    %c0_11 = arith.constant 0 : index
    %c16 = arith.constant 16 : index
    %19 = vector.load %arg6[%c0_11, %c16] : memref<224x72xbf16, #tpu.memory_space<vmem>>, vector<224x8xbf16>
    tpu.vector_store %arg6[%c0_11, %c16], %18 {strides = array<i32>} : memref<224x72xbf16, #tpu.memory_space<vmem>>, vector<224x8xbf16>,
    %c1_i32 = arith.constant 1 : i32
    %20 = arith.addi %1, %c1_i32 : i32
    %c0_12 = arith.constant 0 : index
    %21 = arith.index_cast %20 : i32 to index
    %c0_13 = arith.constant 0 : index
    %c0_14 = arith.constant 0 : index
    %22 = vector.load %arg2[%c0_12, %21, %c0_13, %c0_14] : memref<1x16x18x8xbf16, #tpu.memory_space<vmem>>, vector<1x14x16x8xbf16>
    %23 = vector.shape_cast %22 : vector<1x14x16x8xbf16> to vector<14x16x8xbf16>
    %24 = vector.shape_cast %23 : vector<14x16x8xbf16> to vector<224x8xbf16>
    %c0_15 = arith.constant 0 : index
    %c24 = arith.constant 24 : index
    %25 = vector.load %arg6[%c0_15, %c24] : memref<224x72xbf16, #tpu.memory_space<vmem>>, vector<224x8xbf16>
    tpu.vector_store %arg6[%c0_15, %c24], %24 {strides = array<i32>} : memref<224x72xbf16, #tpu.memory_space<vmem>>, vector<224x8xbf16>,
    %c1_i32_16 = arith.constant 1 : i32
    %26 = arith.addi %1, %c1_i32_16 : i32
    %c0_17 = arith.constant 0 : index
    %27 = arith.index_cast %26 : i32 to index
    %c1_18 = arith.constant 1 : index
    %c0_19 = arith.constant 0 : index
    %28 = vector.load %arg2[%c0_17, %27, %c1_18, %c0_19] : memref<1x16x18x8xbf16, #tpu.memory_space<vmem>>, vector<1x14x16x8xbf16>
    %29 = vector.shape_cast %28 : vector<1x14x16x8xbf16> to vector<14x16x8xbf16>
    %30 = vector.shape_cast %29 : vector<14x16x8xbf16> to vector<224x8xbf16>
    %c0_20 = arith.constant 0 : index
    %c32 = arith.constant 32 : index
    %31 = vector.load %arg6[%c0_20, %c32] : memref<224x72xbf16, #tpu.memory_space<vmem>>, vector<224x8xbf16>
    tpu.vector_store %arg6[%c0_20, %c32], %30 {strides = array<i32>} : memref<224x72xbf16, #tpu.memory_space<vmem>>, vector<224x8xbf16>,
    %c1_i32_21 = arith.constant 1 : i32
    %32 = arith.addi %1, %c1_i32_21 : i32
    %c0_22 = arith.constant 0 : index
    %33 = arith.index_cast %32 : i32 to index
    %c2_23 = arith.constant 2 : index
    %c0_24 = arith.constant 0 : index
    %34 = vector.load %arg2[%c0_22, %33, %c2_23, %c0_24] : memref<1x16x18x8xbf16, #tpu.memory_space<vmem>>, vector<1x14x16x8xbf16>
    %35 = vector.shape_cast %34 : vector<1x14x16x8xbf16> to vector<14x16x8xbf16>
    %36 = vector.shape_cast %35 : vector<14x16x8xbf16> to vector<224x8xbf16>
    %c0_25 = arith.constant 0 : index
    %c40 = arith.constant 40 : index
    %37 = vector.load %arg6[%c0_25, %c40] : memref<224x72xbf16, #tpu.memory_space<vmem>>, vector<224x8xbf16>
    tpu.vector_store %arg6[%c0_25, %c40], %36 {strides = array<i32>} : memref<224x72xbf16, #tpu.memory_space<vmem>>, vector<224x8xbf16>,
    %c2_i32 = arith.constant 2 : i32
    %38 = arith.addi %1, %c2_i32 : i32
    %c0_26 = arith.constant 0 : index
    %39 = arith.index_cast %38 : i32 to index
    %c0_27 = arith.constant 0 : index
    %c0_28 = arith.constant 0 : index
    %40 = vector.load %arg2[%c0_26, %39, %c0_27, %c0_28] : memref<1x16x18x8xbf16, #tpu.memory_space<vmem>>, vector<1x14x16x8xbf16>
    %41 = vector.shape_cast %40 : vector<1x14x16x8xbf16> to vector<14x16x8xbf16>
    %42 = vector.shape_cast %41 : vector<14x16x8xbf16> to vector<224x8xbf16>
    %c0_29 = arith.constant 0 : index
    %c48 = arith.constant 48 : index
    %43 = vector.load %arg6[%c0_29, %c48] : memref<224x72xbf16, #tpu.memory_space<vmem>>, vector<224x8xbf16>
    tpu.vector_store %arg6[%c0_29, %c48], %42 {strides = array<i32>} : memref<224x72xbf16, #tpu.memory_space<vmem>>, vector<224x8xbf16>,
    %c2_i32_30 = arith.constant 2 : i32
    %44 = arith.addi %1, %c2_i32_30 : i32
    %c0_31 = arith.constant 0 : index
    %45 = arith.index_cast %44 : i32 to index
    %c1_32 = arith.constant 1 : index
    %c0_33 = arith.constant 0 : index
    %46 = vector.load %arg2[%c0_31, %45, %c1_32, %c0_33] : memref<1x16x18x8xbf16, #tpu.memory_space<vmem>>, vector<1x14x16x8xbf16>
    %47 = vector.shape_cast %46 : vector<1x14x16x8xbf16> to vector<14x16x8xbf16>
    %48 = vector.shape_cast %47 : vector<14x16x8xbf16> to vector<224x8xbf16>
    %c0_34 = arith.constant 0 : index
    %c56 = arith.constant 56 : index
    %49 = vector.load %arg6[%c0_34, %c56] : memref<224x72xbf16, #tpu.memory_space<vmem>>, vector<224x8xbf16>
    tpu.vector_store %arg6[%c0_34, %c56], %48 {strides = array<i32>} : memref<224x72xbf16, #tpu.memory_space<vmem>>, vector<224x8xbf16>,
    %c2_i32_35 = arith.constant 2 : i32
    %50 = arith.addi %1, %c2_i32_35 : i32
    %c0_36 = arith.constant 0 : index
    %51 = arith.index_cast %50 : i32 to index
    %c2_37 = arith.constant 2 : index
    %c0_38 = arith.constant 0 : index
    %52 = vector.load %arg2[%c0_36, %51, %c2_37, %c0_38] : memref<1x16x18x8xbf16, #tpu.memory_space<vmem>>, vector<1x14x16x8xbf16>
    %53 = vector.shape_cast %52 : vector<1x14x16x8xbf16> to vector<14x16x8xbf16>
    %54 = vector.shape_cast %53 : vector<14x16x8xbf16> to vector<224x8xbf16>
    %c0_39 = arith.constant 0 : index
    %c64 = arith.constant 64 : index
    %55 = vector.load %arg6[%c0_39, %c64] : memref<224x72xbf16, #tpu.memory_space<vmem>>, vector<224x8xbf16>
    tpu.vector_store %arg6[%c0_39, %c64], %54 {strides = array<i32>} : memref<224x72xbf16, #tpu.memory_space<vmem>>, vector<224x8xbf16>,
    %c0_40 = arith.constant 0 : index
    %c0_41 = arith.constant 0 : index
    %56 = vector.load %arg6[%c0_40, %c0_41] : memref<224x72xbf16, #tpu.memory_space<vmem>>, vector<224x72xbf16>
    %c0_42 = arith.constant 0 : index
    %c0_43 = arith.constant 0 : index
    %57 = vector.load %arg3[%c0_42, %c0_43] : memref<72x128xbf16, #tpu.memory_space<vmem>>, vector<72x128xbf16>
    %cst = arith.constant dense<0.000000e+00> : vector<224x128xf32>
    %58 = tpu.matmul %56, %57, %cst {dimension_numbers = #tpu.dot_dimension_numbers<[1], [0], [0], [1], [0, 0, 1, 1], [], []>} : vector<224x72xbf16>, vector<72x128xbf16>, vector<224x128xf32> -> vector<224x128xf32>
    %c0_44 = arith.constant 0 : index
    %c0_45 = arith.constant 0 : index
    %59 = vector.load %arg4[%c0_44, %c0_45] : memref<1x128xf32, #tpu.memory_space<vmem>>, vector<1x128xf32>
    %60 = vector.broadcast %59 : vector<1x128xf32> to vector<224x128xf32>
    %61 = arith.addf %58, %60 : vector<224x128xf32>
    %62 = arith.truncf %61 : vector<224x128xf32> to vector<224x128xbf16>
    %c0_46 = arith.constant 0 : index
    %c0_47 = arith.constant 0 : index
    %63 = vector.load %arg5[%c0_46, %c0_47] : memref<224x128xbf16, #tpu.memory_space<vmem>>, vector<224x128xbf16>
    tpu.vector_store %arg5[%c0_46, %c0_47], %62 {strides = array<i32>} : memref<224x128xbf16, #tpu.memory_space<vmem>>, vector<224x128xbf16>,
    return
  }
  func.func @transform_0(%arg0: i32, %arg1: i32) -> (i32, i32, i32, i32) {
    %c0_i32 = arith.constant 0 : i32
    %c0_i32_0 = arith.constant 0 : i32
    %c0_i32_1 = arith.constant 0 : i32
    %c0_i32_2 = arith.constant 0 : i32
    return %arg0, %c0_i32, %c0_i32_0, %c0_i32_1 : i32, i32, i32, i32
  }
  func.func @transform_1(%arg0: i32, %arg1: i32) -> (i32, i32) {
    %c0_i32 = arith.constant 0 : i32
    %c0_i32_0 = arith.constant 0 : i32
    %c0_i32_1 = arith.constant 0 : i32
    return %c0_i32, %c0_i32_0 : i32, i32
  }
  func.func @transform_2(%arg0: i32, %arg1: i32) -> (i32, i32) {
    %c0_i32 = arith.constant 0 : i32
    %c0_i32_0 = arith.constant 0 : i32
    %c0_i32_1 = arith.constant 0 : i32
    return %c0_i32, %c0_i32_0 : i32, i32
  }
  func.func @transform_3(%arg0: i32, %arg1: i32) -> (i32, i32) {
    %c1_i32 = arith.constant 1 : i32
    %0 = arith.muli %arg0, %c1_i32 : i32
    %1 = arith.addi %0, %arg1 : i32
    %c0_i32 = arith.constant 0 : i32
    %c0_i32_0 = arith.constant 0 : i32
    return %1, %c0_i32 : i32, i32
  }
}

</mosaic_0001>

<llo_original>
// kernel: tpu_custom_call.1
$region0: #{tpu_custom_call.1}
  #allocation0 [shape = 'u32[]', space=smem, size = 0x4, offset = 0x4, fixed_abs, tag = 'smem constant byte address 0x4 - core index']
  #allocation1 [shape = 'u32[144,128]{1,0:T(1,128)}', space=vmem, size = 0x12000, scoped, tag = 'internal scratch']
  #allocation2 [shape = 'bf16[224,72]{1,0:T(16,128)(2,1)}', space=vmem, size = 0xe000, scoped, tag = 'scratch operand']
  %s0 = inlined_call_operand.vmem [shape: bf16[2,16,18,8], index: 0, kind: input, shape index: {}]
  %s1 = inlined_call_operand.vmem [shape: bf16[72,128], index: 1, kind: input, shape index: {}]
  %s2 = inlined_call_operand.vmem [shape: f32[1,128], index: 2, kind: input, shape index: {}]
  %s3 = inlined_call_operand.hbm [shape: bf16[448,128], index: 3, kind: output, shape index: {}]
  %s4 = sld [smem:[#allocation0]]
  $region45: #{tpu_custom_call.1} parent=0
    _
  %s6 = ssub.s32 1, %s4
  %s7 = scalar_select 0, %s6, %s4
  $region1: #{tpu_custom_call.1} parent=0
    #allocation3 [shape = 'u8[114688]{0}', space=vmem, size = 0x1c000, scoped, tag = 'output window, operand 0']
    #allocation4 [shape = 's32[2]{0}', space=sflag, size = 0x8, scoped, tag = 'scoped memory for tpu_custom_call.1']
    %8 = vsyncpa [#allocation4], 0
    %s9 = scalar_lea.sflag [#allocation4], 1
    %10 = vsyncpa %s9, 0
    loop: start=0, step=1, limit=4
    $region2: #{tpu_custom_call.1} parent=1 // loop_pre_header
      _
    $region3: #{tpu_custom_call.1} parent=1 // loop_header
      %s12 = sphi 0, %s16
      %p13 = scmp.ge.s32.totalorder %s12, 4
      %s19 = sphi 0, %s31
      %s20 = sphi 0, %s27
      %s21 = sphi 0, %s19
      %s22 = sphi 0, %s20
      %s23 = sphi 0, %s21
      %s24 = sphi 0, %s22
      %s34 = sphi 0, %s36
      %s37 = sphi 0, %s34
      %s38 = sphi 0, %s37
      %s54 = sphi 0, %s38
      %s58 = sphi 0, %s58
      %s60 = sphi 0, %s58
      %s61 = sphi 0, %s60
      %s75 = sphi 0, %s61
      %s79 = sphi 0, %s79
      %s81 = sphi 0, %s79
      %s82 = sphi 0, %s81
      %s96 = sphi 0, %s82
      %s104 = sphi 0, %s106
      %s107 = sphi 0, %s104
      %s108 = sphi 0, %s107
      %s124 = sphi 0, %s108
    $region4: #{tpu_custom_call.1} parent=1 // loop_header_branch
      %15 = sbr.rel (%p13) target = $region8
    $region5: #{tpu_custom_call.1} parent=1 // loop_body
      %s17 = ssub.s32 %s12, 1
      %s18 = ssub.s32 %s12, 2
      %s25 = sadd.s32 1, %s20
      %p26 = scmp.ge.s32.totalorder %s25, 1
      %s27 = scalar_select %p26, 0, %s25
      %s28 = sadd.s32 1, %s19
      %s29 = scalar_select %p26, %s28, %s19
      %p30 = scmp.ge.s32.totalorder %s29, 2
      %s31 = scalar_select %p30, 0, %s29
      %s32 = ssub.s32 %s19, %s31
      %p33 = scmp.eq.s32.totalorder %s32, 0
      %s35 = sadd.s32 %s34, 1
      %s36 = scalar_select %p33, %s34, %s35
      %p39 = pneg %p33
      %p40 = scmp.eq.s32.totalorder %s12, 1
      %p41 = por %p39, %p40
      %p42 = scmp.ne.s32.totalorder %s34, %s37
      %p43 = scmp.eq.s32.totalorder %s12, 0
      %p44 = por %p42, %p43
      %p45 = scmp.ne.s32.totalorder %s34, %s37
      %p46 = scmp.eq.s32.totalorder %s17, 1
      %p47 = por %p45, %p46
      %p48 = scmp.ne.s32.totalorder %s37, %s38
      %p49 = scmp.eq.s32.totalorder %s17, 0
      %p50 = por %p48, %p49
      %p51 = scmp.ne.s32.totalorder %s37, %s38
      %p52 = scmp.eq.s32.totalorder %s18, 1
      %p53 = por %p51, %p52
      %p55 = scmp.ne.s32.totalorder %s38, %s54
      %p56 = scmp.eq.s32.totalorder %s18, 0
      %p57 = por %p55, %p56
      %s59 = sadd.s32 %s58, 1
      %p62 = scmp.eq.s32.totalorder %s12, 1
      %p63 = scmp.ne.s32.totalorder %s58, %s60
      %p64 = scmp.eq.s32.totalorder %s12, 0
      %p65 = por %p63, %p64
      %p66 = scmp.ne.s32.totalorder %s58, %s60
      %p67 = scmp.eq.s32.totalorder %s17, 1
      %p68 = por %p66, %p67
      %p69 = scmp.ne.s32.totalorder %s60, %s61
      %p70 = scmp.eq.s32.totalorder %s17, 0
      %p71 = por %p69, %p70
      %p72 = scmp.ne.s32.totalorder %s60, %s61
      %p73 = scmp.eq.s32.totalorder %s18, 1
      %p74 = por %p72, %p73
      %p76 = scmp.ne.s32.totalorder %s61, %s75
      %p77 = scmp.eq.s32.totalorder %s18, 0
      %p78 = por %p76, %p77
      %s80 = sadd.s32 %s79, 1
      %p83 = scmp.eq.s32.totalorder %s12, 1
      %p84 = scmp.ne.s32.totalorder %s79, %s81
      %p85 = scmp.eq.s32.totalorder %s12, 0
      %p86 = por %p84, %p85
      %p87 = scmp.ne.s32.totalorder %s79, %s81
      %p88 = scmp.eq.s32.totalorder %s17, 1
      %p89 = por %p87, %p88
      %p90 = scmp.ne.s32.totalorder %s81, %s82
      %p91 = scmp.eq.s32.totalorder %s17, 0
      %p92 = por %p90, %p91
      %p93 = scmp.ne.s32.totalorder %s81, %s82
      %p94 = scmp.eq.s32.totalorder %s18, 1
      %p95 = por %p93, %p94
      %p97 = scmp.ne.s32.totalorder %s82, %s96
      %p98 = scmp.eq.s32.totalorder %s18, 0
      %p99 = por %p97, %p98
      %s100 = sadd.s32 %s19, %s20
      %s101 = sadd.s32 %s31, %s27
      %s102 = ssub.s32 %s100, %s101
      %p103 = scmp.eq.s32.totalorder %s102, 0
      %s105 = sadd.s32 %s104, 1
      %s106 = scalar_select %p103, %s104, %s105
      %p109 = pneg %p103
      %p110 = scmp.eq.s32.totalorder %s12, 1
      %p111 = por %p109, %p110
      %p112 = scmp.ne.s32.totalorder %s104, %s107
      %p113 = scmp.eq.s32.totalorder %s12, 0
      %p114 = por %p112, %p113
      %p115 = scmp.ne.s32.totalorder %s104, %s107
      %p116 = scmp.eq.s32.totalorder %s17, 1
      %p117 = por %p115, %p116
      %p118 = scmp.ne.s32.totalorder %s107, %s108
      %p119 = scmp.eq.s32.totalorder %s17, 0
      %p120 = por %p118, %p119
      %p121 = scmp.ne.s32.totalorder %s107, %s108
      %p122 = scmp.eq.s32.totalorder %s18, 1
      %p123 = por %p121, %p122
      %p125 = scmp.ne.s32.totalorder %s108, %s124
      %p126 = scmp.eq.s32.totalorder %s18, 0
      %p127 = por %p125, %p126
      %p128 = scmp.le.s32.totalorder 1, %s12
      %p129 = scmp.lt.s32.totalorder %s12, 3
      %p130 = pnand %p128, %p129
      %p131 = pneg %p130
      // Predicated region
      $region9: #{tpu_custom_call.1} parent=5 // pred_check
        _
      $region10: #{tpu_custom_call.1} parent=5 // pred_check_branch
        %133 = sbr.rel (%p130) target = $region12
      $region11: #{tpu_custom_call.1} parent=5 // pred_region
        %s134 = ssub.s32 %s12, 1
        // Predicated region
        $region13: #{tpu_custom_call.1} parent=11 // pred_check
          %p135 = pneg %p71
        $region14: #{tpu_custom_call.1} parent=11 // pred_check_branch
          %137 = sbr.rel (%p135) target = $region16
        $region15: #{tpu_custom_call.1} parent=11 // pred_region
          _
        $region16: #{tpu_custom_call.1} parent=11 // pred_fallthru
          _
        // Predicated region
        $region17: #{tpu_custom_call.1} parent=11 // pred_check
          %p138 = pneg %p92
        $region18: #{tpu_custom_call.1} parent=11 // pred_check_branch
          %140 = sbr.rel (%p138) target = $region20
        $region19: #{tpu_custom_call.1} parent=11 // pred_region
          _
        $region20: #{tpu_custom_call.1} parent=11 // pred_fallthru
          _
      $region12: #{tpu_custom_call.1} parent=5 // pred_fallthru
        _
      %p141 = scmp.lt.s32.totalorder %s12, 2
      // Predicated region
      $region21: #{tpu_custom_call.1} parent=5 // pred_check
        %p142 = pneg %p141
      $region22: #{tpu_custom_call.1} parent=5 // pred_check_branch
        %144 = sbr.rel (%p142) target = $region24
      $region23: #{tpu_custom_call.1} parent=5 // pred_region
        // Predicated region
        $region25: #{tpu_custom_call.1} parent=23 // pred_check
          %p145 = pneg %p44
        $region26: #{tpu_custom_call.1} parent=23 // pred_check_branch
          %147 = sbr.rel (%p145) target = $region28
        $region27: #{tpu_custom_call.1} parent=23 // pred_region
          %p148 = scmp.lt.s32.totalorder %s19, 1
          %s149 = scalar_select %p148, %s19, 1
          %s150 = smul.addr %s149, 48
          %s151 = smul.addr %s150, 4
          %s152 = scalar_lea.vmem %s0, %s151
        $region28: #{tpu_custom_call.1} parent=23 // pred_fallthru
          _
      $region24: #{tpu_custom_call.1} parent=5 // pred_fallthru
        _
      %p153 = scmp.le.s32.totalorder 1, %s12
      %p154 = scmp.lt.s32.totalorder %s12, 3
      %p155 = pnand %p153, %p154
      %p156 = pneg %p155
      // Predicated region
      $region29: #{tpu_custom_call.1} parent=5 // pred_check
        _
      $region30: #{tpu_custom_call.1} parent=5 // pred_check_branch
        %158 = sbr.rel (%p155) target = $region32
      $region31: #{tpu_custom_call.1} parent=5 // pred_region
        %s159 = ssub.s32 %s12, 1
        %p160 = scmp.lt.s32.totalorder %s21, 1
        %s161 = scalar_select %p160, %s21, 1
        %s162 = smul.addr %s161, 48
        %s163 = smul.addr %s162, 4
        %s164 = scalar_lea.vmem %s0, %s163
        %p165 = pneg %p50
        %p166 = pneg %p47
        %p167 = pneg %p71
        %p168 = pneg %p68
        %p169 = pneg %p92
        %p170 = pneg %p89
        %p171 = pneg %p120
        %p172 = pneg %p117
        %s173 = sand.u32 %s107, 1
        %s174 = scalar_lea.sflag [#allocation4], %s173
        %s175 = sand.u32 %s107, 1
        %s176 = smul.addr %s175, 112
        %s177 = scalar_lea.vmem [#allocation3], %s176
        %p178 = scmp.lt.s32.totalorder %s21, 1
        %s179 = scalar_select %p178, %s21, 1
        %s180 = smul.addr %s179, 48
        %s181 = smul.addr %s180, 4
        %s182 = scalar_lea.vmem %s0, %s181
        %s183 = sadd.s32 %s21, %s22
        %s184 = smul.u32 28, %s183
        %s186 = smul.u32 %s22, 14
        %s187 = smul.u32 %s186, 3
        %s188 = smul.addr %s187, 4
        %s189 = scalar_lea.vmem %s182, %s188
        %v190 = vld [vmem:[%s189] sm:$0xf]
        %v191 = vld [vmem:[%s189 + $0x4] sm:$0xf]
        %v192 = vld [vmem:[%s189 + $0xc] sm:$0xf]
        %v193 = vld [vmem:[%s189 + $0x10] sm:$0xf]
        %v194 = vld [vmem:[%s189 + $0x18] sm:$0xf]
        %v195 = vld [vmem:[%s189 + $0x1c] sm:$0xf]
        %v196 = vld [vmem:[%s189 + $0x24] sm:$0xf]
        %v197 = vld [vmem:[%s189 + $0x28] sm:$0xf]
        %v198 = vld [vmem:[%s189 + $0x30] sm:$0xf]
        %v199 = vld [vmem:[%s189 + $0x34] sm:$0xf]
        %v200 = vld [vmem:[%s189 + $0x3c] sm:$0xf]
        %v201 = vld [vmem:[%s189 + $0x40] sm:$0xf]
        %v202 = vld [vmem:[%s189 + $0x48] sm:$0xf]
        %v203 = vld [vmem:[%s189 + $0x4c] sm:$0xf]
        %v204 = vld [vmem:[%s189 + $0x54] sm:$0xf]
        %v205 = vld [vmem:[%s189 + $0x58] sm:$0xf]
        %v206 = vld [vmem:[%s189 + $0x60] sm:$0xf]
        %v207 = vld [vmem:[%s189 + $0x64] sm:$0xf]
        %v208 = vld [vmem:[%s189 + $0x6c] sm:$0xf]
        %v209 = vld [vmem:[%s189 + $0x70] sm:$0xf]
        %v210 = vld [vmem:[%s189 + $0x78] sm:$0xf]
        %v211 = vld [vmem:[%s189 + $0x7c] sm:$0xf]
        %v212 = vld [vmem:[%s189 + $0x84] sm:$0xf]
        %v213 = vld [vmem:[%s189 + $0x88] sm:$0xf]
        %v214 = vld [vmem:[%s189 + $0x90] sm:$0xf]
        %v215 = vld [vmem:[%s189 + $0x94] sm:$0xf]
        %v216 = vld [vmem:[%s189 + $0x9c] sm:$0xf]
        %v217 = vld [vmem:[%s189 + $0xa0] sm:$0xf]
        %v246 = vunpack.c.l.b16 %v190
        %v247 = vunpack.c.l.b16 %v191
        %v248 = vunpack.c.l.b16 %v192
        %v249 = vunpack.c.l.b16 %v193
        %v250 = vunpack.c.l.b16 %v194
        %v251 = vunpack.c.l.b16 %v195
        %v252 = vunpack.c.l.b16 %v196
        %v253 = vunpack.c.l.b16 %v197
        %v254 = vunpack.c.l.b16 %v198
        %v255 = vunpack.c.l.b16 %v199
        %v256 = vunpack.c.l.b16 %v200
        %v257 = vunpack.c.l.b16 %v201
        %v258 = vunpack.c.l.b16 %v202
        %v259 = vunpack.c.l.b16 %v203
        %v260 = vunpack.c.l.b16 %v204
        %v261 = vunpack.c.l.b16 %v205
        %v262 = vunpack.c.l.b16 %v206
        %v263 = vunpack.c.l.b16 %v207
        %v264 = vunpack.c.l.b16 %v208
        %v265 = vunpack.c.l.b16 %v209
        %v266 = vunpack.c.l.b16 %v210
        %v267 = vunpack.c.l.b16 %v211
        %v268 = vunpack.c.l.b16 %v212
        %v269 = vunpack.c.l.b16 %v213
        %v270 = vunpack.c.l.b16 %v214
        %v271 = vunpack.c.l.b16 %v215
        %v272 = vunpack.c.l.b16 %v216
        %v273 = vunpack.c.l.b16 %v217
        %v274 = vpack.c.b16 %v247, %v246
        %v275 = vpack.c.b16 %v249, %v248
        %v276 = vpack.c.b16 %v251, %v250
        %v277 = vpack.c.b16 %v253, %v252
        %v278 = vpack.c.b16 %v255, %v254
        %v279 = vpack.c.b16 %v257, %v256
        %v280 = vpack.c.b16 %v259, %v258
        %v281 = vpack.c.b16 %v261, %v260
        %v282 = vpack.c.b16 %v263, %v262
        %v283 = vpack.c.b16 %v265, %v264
        %v284 = vpack.c.b16 %v267, %v266
        %v285 = vpack.c.b16 %v269, %v268
        %v286 = vpack.c.b16 %v271, %v270
        %v287 = vpack.c.b16 %v273, %v272
        %vm302 = vcmask 64512
        %303 = vst.msk [vmem:[#allocation2] sm:$0xff] %vm302, %v274
        %304 = vst.msk [vmem:[#allocation2 + $0x8] sm:$0xff] %vm302, %v275
        %305 = vst.msk [vmem:[#allocation2 + $0x10] sm:$0xff] %vm302, %v276
        %306 = vst.msk [vmem:[#allocation2 + $0x18] sm:$0xff] %vm302, %v277
        %307 = vst.msk [vmem:[#allocation2 + $0x20] sm:$0xff] %vm302, %v278
        %308 = vst.msk [vmem:[#allocation2 + $0x28] sm:$0xff] %vm302, %v279
        %309 = vst.msk [vmem:[#allocation2 + $0x30] sm:$0xff] %vm302, %v280
        %310 = vst.msk [vmem:[#allocation2 + $0x38] sm:$0xff] %vm302, %v281
        %311 = vst.msk [vmem:[#allocation2 + $0x40] sm:$0xff] %vm302, %v282
        %312 = vst.msk [vmem:[#allocation2 + $0x48] sm:$0xff] %vm302, %v283
        %313 = vst.msk [vmem:[#allocation2 + $0x50] sm:$0xff] %vm302, %v284
        %314 = vst.msk [vmem:[#allocation2 + $0x58] sm:$0xff] %vm302, %v285
        %315 = vst.msk [vmem:[#allocation2 + $0x60] sm:$0xff] %vm302, %v286
        %316 = vst.msk [vmem:[#allocation2 + $0x68] sm:$0xff] %vm302, %v287
        %v317 = vld [vmem:[%s189] sm:$0xf]
        %v318 = vld [vmem:[%s189 + $0x4] sm:$0xf]
        %v319 = vld [vmem:[%s189 + $0x8] sm:$0x1]
        %v320 = vld [vmem:[%s189 + $0xc] sm:$0xf]
        %v321 = vld [vmem:[%s189 + $0x10] sm:$0xf]
        %v322 = vld [vmem:[%s189 + $0x14] sm:$0x1]
        %v323 = vld [vmem:[%s189 + $0x18] sm:$0xf]
        %v324 = vld [vmem:[%s189 + $0x1c] sm:$0xf]
        %v325 = vld [vmem:[%s189 + $0x20] sm:$0x1]
        %v326 = vld [vmem:[%s189 + $0x24] sm:$0xf]
        %v327 = vld [vmem:[%s189 + $0x28] sm:$0xf]
        %v328 = vld [vmem:[%s189 + $0x2c] sm:$0x1]
        %v329 = vld [vmem:[%s189 + $0x30] sm:$0xf]
        %v330 = vld [vmem:[%s189 + $0x34] sm:$0xf]
        %v331 = vld [vmem:[%s189 + $0x38] sm:$0x1]
        %v332 = vld [vmem:[%s189 + $0x3c] sm:$0xf]
        %v333 = vld [vmem:[%s189 + $0x40] sm:$0xf]
        %v334 = vld [vmem:[%s189 + $0x44] sm:$0x1]
        %v335 = vld [vmem:[%s189 + $0x48] sm:$0xf]
        %v336 = vld [vmem:[%s189 + $0x4c] sm:$0xf]
        %v337 = vld [vmem:[%s189 + $0x50] sm:$0x1]
        %v338 = vld [vmem:[%s189 + $0x54] sm:$0xf]
        %v339 = vld [vmem:[%s189 + $0x58] sm:$0xf]
        %v340 = vld [vmem:[%s189 + $0x5c] sm:$0x1]
        %v341 = vld [vmem:[%s189 + $0x60] sm:$0xf]
        %v342 = vld [vmem:[%s189 + $0x64] sm:$0xf]
        %v343 = vld [vmem:[%s189 + $0x68] sm:$0x1]
        %v344 = vld [vmem:[%s189 + $0x6c] sm:$0xf]
        %v345 = vld [vmem:[%s189 + $0x70] sm:$0xf]
        %v346 = vld [vmem:[%s189 + $0x74] sm:$0x1]
        %v347 = vld [vmem:[%s189 + $0x78] sm:$0xf]
        %v348 = vld [vmem:[%s189 + $0x7c] sm:$0xf]
        %v349 = vld [vmem:[%s189 + $0x80] sm:$0x1]
        %v350 = vld [vmem:[%s189 + $0x84] sm:$0xf]
        %v351 = vld [vmem:[%s189 + $0x88] sm:$0xf]
        %v352 = vld [vmem:[%s189 + $0x8c] sm:$0x1]
        %v353 = vld [vmem:[%s189 + $0x90] sm:$0xf]
        %v354 = vld [vmem:[%s189 + $0x94] sm:$0xf]
        %v355 = vld [vmem:[%s189 + $0x98] sm:$0x1]
        %v356 = vld [vmem:[%s189 + $0x9c] sm:$0xf]
        %v357 = vld [vmem:[%s189 + $0xa0] sm:$0xf]
        %v358 = vld [vmem:[%s189 + $0xa4] sm:$0x1]
        %vm359 = vsmask.f32 3328
        %vm360 = vsmask.f32 7440
        %vm361 = vmor %vm359, %vm360
        %v363 = vshrl.u32 %v317, 16
        %v365 = vrot.slane %v363, 4
        %v366 = vshll.u32 %v317, 16
        %v368 = vrot.slane %v366, 5
        %v369 = vor.u32 %v365, %v368
        %v370 = vrot.slane %v369, 4
        %v372 = vshll.u32 %v318, 16
        %v374 = vrot.slane %v372, 5
        %v375 = vsel %vm361, %v370, %v374
        %v376 = vshrl.u32 %v318, 16
        %v378 = vrot.slane %v376, 4
        %v379 = vor.u32 %v378, %v374
        %v380 = vrot.slane %v379, 4
        %v382 = vshll.u32 %v319, 16
        %v384 = vrot.slane %v382, 5
        %v385 = vsel %vm361, %v380, %v384
        %v387 = vshrl.u32 %v320, 16
        %v389 = vrot.slane %v387, 4
        %v390 = vshll.u32 %v320, 16
        %v392 = vrot.slane %v390, 5
        %v393 = vor.u32 %v389, %v392
        %v394 = vrot.slane %v393, 4
        %v396 = vshll.u32 %v321, 16
        %v398 = vrot.slane %v396, 5
        %v399 = vsel %vm361, %v394, %v398
        %v400 = vshrl.u32 %v321, 16
        %v402 = vrot.slane %v400, 4
        %v403 = vor.u32 %v402, %v398
        %v404 = vrot.slane %v403, 4
        %v406 = vshll.u32 %v322, 16
        %v408 = vrot.slane %v406, 5
        %v409 = vsel %vm361, %v404, %v408
        %v411 = vshrl.u32 %v323, 16
        %v413 = vrot.slane %v411, 4
        %v414 = vshll.u32 %v323, 16
        %v416 = vrot.slane %v414, 5
        %v417 = vor.u32 %v413, %v416
        %v418 = vrot.slane %v417, 4
        %v420 = vshll.u32 %v324, 16
        %v422 = vrot.slane %v420, 5
        %v423 = vsel %vm361, %v418, %v422
        %v424 = vshrl.u32 %v324, 16
        %v426 = vrot.slane %v424, 4
        %v427 = vor.u32 %v426, %v422
        %v428 = vrot.slane %v427, 4
        %v430 = vshll.u32 %v325, 16
        %v432 = vrot.slane %v430, 5
        %v433 = vsel %vm361, %v428, %v432
        %v435 = vshrl.u32 %v326, 16
        %v437 = vrot.slane %v435, 4
        %v438 = vshll.u32 %v326, 16
        %v440 = vrot.slane %v438, 5
        %v441 = vor.u32 %v437, %v440
        %v442 = vrot.slane %v441, 4
        %v444 = vshll.u32 %v327, 16
        %v446 = vrot.slane %v444, 5
        %v447 = vsel %vm361, %v442, %v446
        %v448 = vshrl.u32 %v327, 16
        %v450 = vrot.slane %v448, 4
        %v451 = vor.u32 %v450, %v446
        %v452 = vrot.slane %v451, 4
        %v454 = vshll.u32 %v328, 16
        %v456 = vrot.slane %v454, 5
        %v457 = vsel %vm361, %v452, %v456
        %v459 = vshrl.u32 %v329, 16
        %v461 = vrot.slane %v459, 4
        %v462 = vshll.u32 %v329, 16
        %v464 = vrot.slane %v462, 5
        %v465 = vor.u32 %v461, %v464
        %v466 = vrot.slane %v465, 4
        %v468 = vshll.u32 %v330, 16
        %v470 = vrot.slane %v468, 5
        %v471 = vsel %vm361, %v466, %v470
        %v472 = vshrl.u32 %v330, 16
        %v474 = vrot.slane %v472, 4
        %v475 = vor.u32 %v474, %v470
        %v476 = vrot.slane %v475, 4
        %v478 = vshll.u32 %v331, 16
        %v480 = vrot.slane %v478, 5
        %v481 = vsel %vm361, %v476, %v480
        %v483 = vshrl.u32 %v332, 16
        %v485 = vrot.slane %v483, 4
        %v486 = vshll.u32 %v332, 16
        %v488 = vrot.slane %v486, 5
        %v489 = vor.u32 %v485, %v488
        %v490 = vrot.slane %v489, 4
        %v492 = vshll.u32 %v333, 16
        %v494 = vrot.slane %v492, 5
        %v495 = vsel %vm361, %v490, %v494
        %v496 = vshrl.u32 %v333, 16
        %v498 = vrot.slane %v496, 4
        %v499 = vor.u32 %v498, %v494
        %v500 = vrot.slane %v499, 4
        %v502 = vshll.u32 %v334, 16
        %v504 = vrot.slane %v502, 5
        %v505 = vsel %vm361, %v500, %v504
        %v507 = vshrl.u32 %v335, 16
        %v509 = vrot.slane %v507, 4
        %v510 = vshll.u32 %v335, 16
        %v512 = vrot.slane %v510, 5
        %v513 = vor.u32 %v509, %v512
        %v514 = vrot.slane %v513, 4
        %v516 = vshll.u32 %v336, 16
        %v518 = vrot.slane %v516, 5
        %v519 = vsel %vm361, %v514, %v518
        %v520 = vshrl.u32 %v336, 16
        %v522 = vrot.slane %v520, 4
        %v523 = vor.u32 %v522, %v518
        %v524 = vrot.slane %v523, 4
        %v526 = vshll.u32 %v337, 16
        %v528 = vrot.slane %v526, 5
        %v529 = vsel %vm361, %v524, %v528
        %v531 = vshrl.u32 %v338, 16
        %v533 = vrot.slane %v531, 4
        %v534 = vshll.u32 %v338, 16
        %v536 = vrot.slane %v534, 5
        %v537 = vor.u32 %v533, %v536
        %v538 = vrot.slane %v537, 4
        %v540 = vshll.u32 %v339, 16
        %v542 = vrot.slane %v540, 5
        %v543 = vsel %vm361, %v538, %v542
        %v544 = vshrl.u32 %v339, 16
        %v546 = vrot.slane %v544, 4
        %v547 = vor.u32 %v546, %v542
        %v548 = vrot.slane %v547, 4
        %v550 = vshll.u32 %v340, 16
        %v552 = vrot.slane %v550, 5
        %v553 = vsel %vm361, %v548, %v552
        %v555 = vshrl.u32 %v341, 16
        %v557 = vrot.slane %v555, 4
        %v558 = vshll.u32 %v341, 16
        %v560 = vrot.slane %v558, 5
        %v561 = vor.u32 %v557, %v560
        %v562 = vrot.slane %v561, 4
        %v564 = vshll.u32 %v342, 16
        %v566 = vrot.slane %v564, 5
        %v567 = vsel %vm361, %v562, %v566
        %v568 = vshrl.u32 %v342, 16
        %v570 = vrot.slane %v568, 4
        %v571 = vor.u32 %v570, %v566
        %v572 = vrot.slane %v571, 4
        %v574 = vshll.u32 %v343, 16
        %v576 = vrot.slane %v574, 5
        %v577 = vsel %vm361, %v572, %v576
        %v579 = vshrl.u32 %v344, 16
        %v581 = vrot.slane %v579, 4
        %v582 = vshll.u32 %v344, 16
        %v584 = vrot.slane %v582, 5
        %v585 = vor.u32 %v581, %v584
        %v586 = vrot.slane %v585, 4
        %v588 = vshll.u32 %v345, 16
        %v590 = vrot.slane %v588, 5
        %v591 = vsel %vm361, %v586, %v590
        %v592 = vshrl.u32 %v345, 16
        %v594 = vrot.slane %v592, 4
        %v595 = vor.u32 %v594, %v590
        %v596 = vrot.slane %v595, 4
        %v598 = vshll.u32 %v346, 16
        %v600 = vrot.slane %v598, 5
        %v601 = vsel %vm361, %v596, %v600
        %v603 = vshrl.u32 %v347, 16
        %v605 = vrot.slane %v603, 4
        %v606 = vshll.u32 %v347, 16
        %v608 = vrot.slane %v606, 5
        %v609 = vor.u32 %v605, %v608
        %v610 = vrot.slane %v609, 4
        %v612 = vshll.u32 %v348, 16
        %v614 = vrot.slane %v612, 5
        %v615 = vsel %vm361, %v610, %v614
        %v616 = vshrl.u32 %v348, 16
        %v618 = vrot.slane %v616, 4
        %v619 = vor.u32 %v618, %v614
        %v620 = vrot.slane %v619, 4
        %v622 = vshll.u32 %v349, 16
        %v624 = vrot.slane %v622, 5
        %v625 = vsel %vm361, %v620, %v624
        %v627 = vshrl.u32 %v350, 16
        %v629 = vrot.slane %v627, 4
        %v630 = vshll.u32 %v350, 16
        %v632 = vrot.slane %v630, 5
        %v633 = vor.u32 %v629, %v632
        %v634 = vrot.slane %v633, 4
        %v636 = vshll.u32 %v351, 16
        %v638 = vrot.slane %v636, 5
        %v639 = vsel %vm361, %v634, %v638
        %v640 = vshrl.u32 %v351, 16
        %v642 = vrot.slane %v640, 4
        %v643 = vor.u32 %v642, %v638
        %v644 = vrot.slane %v643, 4
        %v646 = vshll.u32 %v352, 16
        %v648 = vrot.slane %v646, 5
        %v649 = vsel %vm361, %v644, %v648
        %v651 = vshrl.u32 %v353, 16
        %v653 = vrot.slane %v651, 4
        %v654 = vshll.u32 %v353, 16
        %v656 = vrot.slane %v654, 5
        %v657 = vor.u32 %v653, %v656
        %v658 = vrot.slane %v657, 4
        %v660 = vshll.u32 %v354, 16
        %v662 = vrot.slane %v660, 5
        %v663 = vsel %vm361, %v658, %v662
        %v664 = vshrl.u32 %v354, 16
        %v666 = vrot.slane %v664, 4
        %v667 = vor.u32 %v666, %v662
        %v668 = vrot.slane %v667, 4
        %v670 = vshll.u32 %v355, 16
        %v672 = vrot.slane %v670, 5
        %v673 = vsel %vm361, %v668, %v672
        %v675 = vshrl.u32 %v356, 16
        %v677 = vrot.slane %v675, 4
        %v678 = vshll.u32 %v356, 16
        %v680 = vrot.slane %v678, 5
        %v681 = vor.u32 %v677, %v680
        %v682 = vrot.slane %v681, 4
        %v684 = vshll.u32 %v357, 16
        %v686 = vrot.slane %v684, 5
        %v687 = vsel %vm361, %v682, %v686
        %v688 = vshrl.u32 %v357, 16
        %v690 = vrot.slane %v688, 4
        %v691 = vor.u32 %v690, %v686
        %v692 = vrot.slane %v691, 4
        %v694 = vshll.u32 %v358, 16
        %v696 = vrot.slane %v694, 5
        %v697 = vsel %vm361, %v692, %v696
        %v698 = vunpack.c.l.b16 %v375
        %v699 = vunpack.c.l.b16 %v385
        %v700 = vunpack.c.l.b16 %v399
        %v701 = vunpack.c.l.b16 %v409
        %v702 = vunpack.c.l.b16 %v423
        %v703 = vunpack.c.l.b16 %v433
        %v704 = vunpack.c.l.b16 %v447
        %v705 = vunpack.c.l.b16 %v457
        %v706 = vunpack.c.l.b16 %v471
        %v707 = vunpack.c.l.b16 %v481
        %v708 = vunpack.c.l.b16 %v495
        %v709 = vunpack.c.l.b16 %v505
        %v710 = vunpack.c.l.b16 %v519
        %v711 = vunpack.c.l.b16 %v529
        %v712 = vunpack.c.l.b16 %v543
        %v713 = vunpack.c.l.b16 %v553
        %v714 = vunpack.c.l.b16 %v567
        %v715 = vunpack.c.l.b16 %v577
        %v716 = vunpack.c.l.b16 %v591
        %v717 = vunpack.c.l.b16 %v601
        %v718 = vunpack.c.l.b16 %v615
        %v719 = vunpack.c.l.b16 %v625
        %v720 = vunpack.c.l.b16 %v639
        %v721 = vunpack.c.l.b16 %v649
        %v722 = vunpack.c.l.b16 %v663
        %v723 = vunpack.c.l.b16 %v673
        %v724 = vunpack.c.l.b16 %v687
        %v725 = vunpack.c.l.b16 %v697
        %v726 = vpack.c.b16 %v699, %v698
        %v727 = vpack.c.b16 %v701, %v700
        %v728 = vpack.c.b16 %v703, %v702
        %v729 = vpack.c.b16 %v705, %v704
        %v730 = vpack.c.b16 %v707, %v706
        %v731 = vpack.c.b16 %v709, %v708
        %v732 = vpack.c.b16 %v711, %v710
        %v733 = vpack.c.b16 %v713, %v712
        %v734 = vpack.c.b16 %v715, %v714
        %v735 = vpack.c.b16 %v717, %v716
        %v736 = vpack.c.b16 %v719, %v718
        %v737 = vpack.c.b16 %v721, %v720
        %v738 = vpack.c.b16 %v723, %v722
        %v739 = vpack.c.b16 %v725, %v724
        %740 = vrot.lane.b32.xlu0 %v726, 8
        %v741 = vpop.permute.xlu0 %740
        %742 = vrot.lane.b32.xlu0 %v727, 8
        %v743 = vpop.permute.xlu0 %742
        %744 = vrot.lane.b32.xlu0 %v728, 8
        %v745 = vpop.permute.xlu0 %744
        %746 = vrot.lane.b32.xlu0 %v729, 8
        %v747 = vpop.permute.xlu0 %746
        %748 = vrot.lane.b32.xlu0 %v730, 8
        %v749 = vpop.permute.xlu0 %748
        %750 = vrot.lane.b32.xlu0 %v731, 8
        %v751 = vpop.permute.xlu0 %750
        %752 = vrot.lane.b32.xlu0 %v732, 8
        %v753 = vpop.permute.xlu0 %752
        %754 = vrot.lane.b32.xlu0 %v733, 8
        %v755 = vpop.permute.xlu0 %754
        %756 = vrot.lane.b32.xlu0 %v734, 8
        %v757 = vpop.permute.xlu0 %756
        %758 = vrot.lane.b32.xlu0 %v735, 8
        %v759 = vpop.permute.xlu0 %758
        %760 = vrot.lane.b32.xlu0 %v736, 8
        %v761 = vpop.permute.xlu0 %760
        %762 = vrot.lane.b32.xlu0 %v737, 8
        %v763 = vpop.permute.xlu0 %762
        %764 = vrot.lane.b32.xlu0 %v738, 8
        %v765 = vpop.permute.xlu0 %764
        %766 = vrot.lane.b32.xlu0 %v739, 8
        %v767 = vpop.permute.xlu0 %766
        %vm782 = vcmask 130112
        %783 = vst.msk [vmem:[#allocation2] sm:$0xff] %vm782, %v741
        %784 = vst.msk [vmem:[#allocation2 + $0x8] sm:$0xff] %vm782, %v743
        %785 = vst.msk [vmem:[#allocation2 + $0x10] sm:$0xff] %vm782, %v745
        %786 = vst.msk [vmem:[#allocation2 + $0x18] sm:$0xff] %vm782, %v747
        %787 = vst.msk [vmem:[#allocation2 + $0x20] sm:$0xff] %vm782, %v749
        %788 = vst.msk [vmem:[#allocation2 + $0x28] sm:$0xff] %vm782, %v751
        %789 = vst.msk [vmem:[#allocation2 + $0x30] sm:$0xff] %vm782, %v753
        %790 = vst.msk [vmem:[#allocation2 + $0x38] sm:$0xff] %vm782, %v755
        %791 = vst.msk [vmem:[#allocation2 + $0x40] sm:$0xff] %vm782, %v757
        %792 = vst.msk [vmem:[#allocation2 + $0x48] sm:$0xff] %vm782, %v759
        %793 = vst.msk [vmem:[#allocation2 + $0x50] sm:$0xff] %vm782, %v761
        %794 = vst.msk [vmem:[#allocation2 + $0x58] sm:$0xff] %vm782, %v763
        %795 = vst.msk [vmem:[#allocation2 + $0x60] sm:$0xff] %vm782, %v765
        %796 = vst.msk [vmem:[#allocation2 + $0x68] sm:$0xff] %vm782, %v767
        %v797 = vld [vmem:[%s189] sm:$0xe]
        %v798 = vld [vmem:[%s189 + $0x4] sm:$0xf]
        %v799 = vld [vmem:[%s189 + $0x8] sm:$0x1]
        %v800 = vld [vmem:[%s189 + $0xc] sm:$0xe]
        %v801 = vld [vmem:[%s189 + $0x10] sm:$0xf]
        %v802 = vld [vmem:[%s189 + $0x14] sm:$0x1]
        %v803 = vld [vmem:[%s189 + $0x18] sm:$0xe]
        %v804 = vld [vmem:[%s189 + $0x1c] sm:$0xf]
        %v805 = vld [vmem:[%s189 + $0x20] sm:$0x1]
        %v806 = vld [vmem:[%s189 + $0x24] sm:$0xe]
        %v807 = vld [vmem:[%s189 + $0x28] sm:$0xf]
        %v808 = vld [vmem:[%s189 + $0x2c] sm:$0x1]
        %v809 = vld [vmem:[%s189 + $0x30] sm:$0xe]
        %v810 = vld [vmem:[%s189 + $0x34] sm:$0xf]
        %v811 = vld [vmem:[%s189 + $0x38] sm:$0x1]
        %v812 = vld [vmem:[%s189 + $0x3c] sm:$0xe]
        %v813 = vld [vmem:[%s189 + $0x40] sm:$0xf]
        %v814 = vld [vmem:[%s189 + $0x44] sm:$0x1]
        %v815 = vld [vmem:[%s189 + $0x48] sm:$0xe]
        %v816 = vld [vmem:[%s189 + $0x4c] sm:$0xf]
        %v817 = vld [vmem:[%s189 + $0x50] sm:$0x1]
        %v818 = vld [vmem:[%s189 + $0x54] sm:$0xe]
        %v819 = vld [vmem:[%s189 + $0x58] sm:$0xf]
        %v820 = vld [vmem:[%s189 + $0x5c] sm:$0x1]
        %v821 = vld [vmem:[%s189 + $0x60] sm:$0xe]
        %v822 = vld [vmem:[%s189 + $0x64] sm:$0xf]
        %v823 = vld [vmem:[%s189 + $0x68] sm:$0x1]
        %v824 = vld [vmem:[%s189 + $0x6c] sm:$0xe]
        %v825 = vld [vmem:[%s189 + $0x70] sm:$0xf]
        %v826 = vld [vmem:[%s189 + $0x74] sm:$0x1]
        %v827 = vld [vmem:[%s189 + $0x78] sm:$0xe]
        %v828 = vld [vmem:[%s189 + $0x7c] sm:$0xf]
        %v829 = vld [vmem:[%s189 + $0x80] sm:$0x1]
        %v830 = vld [vmem:[%s189 + $0x84] sm:$0xe]
        %v831 = vld [vmem:[%s189 + $0x88] sm:$0xf]
        %v832 = vld [vmem:[%s189 + $0x8c] sm:$0x1]
        %v833 = vld [vmem:[%s189 + $0x90] sm:$0xe]
        %v834 = vld [vmem:[%s189 + $0x94] sm:$0xf]
        %v835 = vld [vmem:[%s189 + $0x98] sm:$0x1]
        %v836 = vld [vmem:[%s189 + $0x9c] sm:$0xe]
        %v837 = vld [vmem:[%s189 + $0xa0] sm:$0xf]
        %v838 = vld [vmem:[%s189 + $0xa4] sm:$0x1]
        %vm881 = vcmask 1042432
        %vm882 = vcmask 1046532
        %vm883 = vmor %vm881, %vm882
        %v884 = vrot.slane %v797, 5
        %v885 = vrot.slane %v884, 4
        %v886 = vrot.slane %v798, 5
        %v887 = vsel %vm883, %v885, %v886
        %v888 = vrot.slane %v886, 4
        %v889 = vrot.slane %v799, 5
        %v890 = vsel %vm883, %v888, %v889
        %v891 = vrot.slane %v800, 5
        %v892 = vrot.slane %v891, 4
        %v893 = vrot.slane %v801, 5
        %v894 = vsel %vm883, %v892, %v893
        %v895 = vrot.slane %v893, 4
        %v896 = vrot.slane %v802, 5
        %v897 = vsel %vm883, %v895, %v896
        %v898 = vrot.slane %v803, 5
        %v899 = vrot.slane %v898, 4
        %v900 = vrot.slane %v804, 5
        %v901 = vsel %vm883, %v899, %v900
        %v902 = vrot.slane %v900, 4
        %v903 = vrot.slane %v805, 5
        %v904 = vsel %vm883, %v902, %v903
        %v905 = vrot.slane %v806, 5
        %v906 = vrot.slane %v905, 4
        %v907 = vrot.slane %v807, 5
        %v908 = vsel %vm883, %v906, %v907
        %v909 = vrot.slane %v907, 4
        %v910 = vrot.slane %v808, 5
        %v911 = vsel %vm883, %v909, %v910
        %v912 = vrot.slane %v809, 5
        %v913 = vrot.slane %v912, 4
        %v914 = vrot.slane %v810, 5
        %v915 = vsel %vm883, %v913, %v914
        %v916 = vrot.slane %v914, 4
        %v917 = vrot.slane %v811, 5
        %v918 = vsel %vm883, %v916, %v917
        %v919 = vrot.slane %v812, 5
        %v920 = vrot.slane %v919, 4
        %v921 = vrot.slane %v813, 5
        %v922 = vsel %vm883, %v920, %v921
        %v923 = vrot.slane %v921, 4
        %v924 = vrot.slane %v814, 5
        %v925 = vsel %vm883, %v923, %v924
        %v926 = vrot.slane %v815, 5
        %v927 = vrot.slane %v926, 4
        %v928 = vrot.slane %v816, 5
        %v929 = vsel %vm883, %v927, %v928
        %v930 = vrot.slane %v928, 4
        %v931 = vrot.slane %v817, 5
        %v932 = vsel %vm883, %v930, %v931
        %v933 = vrot.slane %v818, 5
        %v934 = vrot.slane %v933, 4
        %v935 = vrot.slane %v819, 5
        %v936 = vsel %vm883, %v934, %v935
        %v937 = vrot.slane %v935, 4
        %v938 = vrot.slane %v820, 5
        %v939 = vsel %vm883, %v937, %v938
        %v940 = vrot.slane %v821, 5
        %v941 = vrot.slane %v940, 4
        %v942 = vrot.slane %v822, 5
        %v943 = vsel %vm883, %v941, %v942
        %v944 = vrot.slane %v942, 4
        %v945 = vrot.slane %v823, 5
        %v946 = vsel %vm883, %v944, %v945
        %v947 = vrot.slane %v824, 5
        %v948 = vrot.slane %v947, 4
        %v949 = vrot.slane %v825, 5
        %v950 = vsel %vm883, %v948, %v949
        %v951 = vrot.slane %v949, 4
        %v952 = vrot.slane %v826, 5
        %v953 = vsel %vm883, %v951, %v952
        %v954 = vrot.slane %v827, 5
        %v955 = vrot.slane %v954, 4
        %v956 = vrot.slane %v828, 5
        %v957 = vsel %vm883, %v955, %v956
        %v958 = vrot.slane %v956, 4
        %v959 = vrot.slane %v829, 5
        %v960 = vsel %vm883, %v958, %v959
        %v961 = vrot.slane %v830, 5
        %v962 = vrot.slane %v961, 4
        %v963 = vrot.slane %v831, 5
        %v964 = vsel %vm883, %v962, %v963
        %v965 = vrot.slane %v963, 4
        %v966 = vrot.slane %v832, 5
        %v967 = vsel %vm883, %v965, %v966
        %v968 = vrot.slane %v833, 5
        %v969 = vrot.slane %v968, 4
        %v970 = vrot.slane %v834, 5
        %v971 = vsel %vm883, %v969, %v970
        %v972 = vrot.slane %v970, 4
        %v973 = vrot.slane %v835, 5
        %v974 = vsel %vm883, %v972, %v973
        %v975 = vrot.slane %v836, 5
        %v976 = vrot.slane %v975, 4
        %v977 = vrot.slane %v837, 5
        %v978 = vsel %vm883, %v976, %v977
        %v979 = vrot.slane %v977, 4
        %v980 = vrot.slane %v838, 5
        %v981 = vsel %vm883, %v979, %v980
        %v982 = vunpack.c.l.b16 %v887
        %v983 = vunpack.c.l.b16 %v890
        %v984 = vunpack.c.l.b16 %v894
        %v985 = vunpack.c.l.b16 %v897
        %v986 = vunpack.c.l.b16 %v901
        %v987 = vunpack.c.l.b16 %v904
        %v988 = vunpack.c.l.b16 %v908
        %v989 = vunpack.c.l.b16 %v911
        %v990 = vunpack.c.l.b16 %v915
        %v991 = vunpack.c.l.b16 %v918
        %v992 = vunpack.c.l.b16 %v922
        %v993 = vunpack.c.l.b16 %v925
        %v994 = vunpack.c.l.b16 %v929
        %v995 = vunpack.c.l.b16 %v932
        %v996 = vunpack.c.l.b16 %v936
        %v997 = vunpack.c.l.b16 %v939
        %v998 = vunpack.c.l.b16 %v943
        %v999 = vunpack.c.l.b16 %v946
        %v1000 = vunpack.c.l.b16 %v950
        %v1001 = vunpack.c.l.b16 %v953
        %v1002 = vunpack.c.l.b16 %v957
        %v1003 = vunpack.c.l.b16 %v960
        %v1004 = vunpack.c.l.b16 %v964
        %v1005 = vunpack.c.l.b16 %v967
        %v1006 = vunpack.c.l.b16 %v971
        %v1007 = vunpack.c.l.b16 %v974
        %v1008 = vunpack.c.l.b16 %v978
        %v1009 = vunpack.c.l.b16 %v981
        %v1010 = vpack.c.b16 %v983, %v982
        %v1011 = vpack.c.b16 %v985, %v984
        %v1012 = vpack.c.b16 %v987, %v986
        %v1013 = vpack.c.b16 %v989, %v988
        %v1014 = vpack.c.b16 %v991, %v990
        %v1015 = vpack.c.b16 %v993, %v992
        %v1016 = vpack.c.b16 %v995, %v994
        %v1017 = vpack.c.b16 %v997, %v996
        %v1018 = vpack.c.b16 %v999, %v998
        %v1019 = vpack.c.b16 %v1001, %v1000
        %v1020 = vpack.c.b16 %v1003, %v1002
        %v1021 = vpack.c.b16 %v1005, %v1004
        %v1022 = vpack.c.b16 %v1007, %v1006
        %v1023 = vpack.c.b16 %v1009, %v1008
        %1024 = vrot.lane.b32.xlu0 %v1010, 16
        %v1025 = vpop.permute.xlu0 %1024
        %1026 = vrot.lane.b32.xlu0 %v1011, 16
        %v1027 = vpop.permute.xlu0 %1026
        %1028 = vrot.lane.b32.xlu0 %v1012, 16
        %v1029 = vpop.permute.xlu0 %1028
        %1030 = vrot.lane.b32.xlu0 %v1013, 16
        %v1031 = vpop.permute.xlu0 %1030
        %1032 = vrot.lane.b32.xlu0 %v1014, 16
        %v1033 = vpop.permute.xlu0 %1032
        %1034 = vrot.lane.b32.xlu0 %v1015, 16
        %v1035 = vpop.permute.xlu0 %1034
        %1036 = vrot.lane.b32.xlu0 %v1016, 16
        %v1037 = vpop.permute.xlu0 %1036
        %1038 = vrot.lane.b32.xlu0 %v1017, 16
        %v1039 = vpop.permute.xlu0 %1038
        %1040 = vrot.lane.b32.xlu0 %v1018, 16
        %v1041 = vpop.permute.xlu0 %1040
        %1042 = vrot.lane.b32.xlu0 %v1019, 16
        %v1043 = vpop.permute.xlu0 %1042
        %1044 = vrot.lane.b32.xlu0 %v1020, 16
        %v1045 = vpop.permute.xlu0 %1044
        %1046 = vrot.lane.b32.xlu0 %v1021, 16
        %v1047 = vpop.permute.xlu0 %1046
        %1048 = vrot.lane.b32.xlu0 %v1022, 16
        %v1049 = vpop.permute.xlu0 %1048
        %1050 = vrot.lane.b32.xlu0 %v1023, 16
        %v1051 = vpop.permute.xlu0 %1050
        %vm1066 = vcmask 195712
        %1067 = vst.msk [vmem:[#allocation2] sm:$0xff] %vm1066, %v1025
        %1068 = vst.msk [vmem:[#allocation2 + $0x8] sm:$0xff] %vm1066, %v1027
        %1069 = vst.msk [vmem:[#allocation2 + $0x10] sm:$0xff] %vm1066, %v1029
        %1070 = vst.msk [vmem:[#allocation2 + $0x18] sm:$0xff] %vm1066, %v1031
        %1071 = vst.msk [vmem:[#allocation2 + $0x20] sm:$0xff] %vm1066, %v1033
        %1072 = vst.msk [vmem:[#allocation2 + $0x28] sm:$0xff] %vm1066, %v1035
        %1073 = vst.msk [vmem:[#allocation2 + $0x30] sm:$0xff] %vm1066, %v1037
        %1074 = vst.msk [vmem:[#allocation2 + $0x38] sm:$0xff] %vm1066, %v1039
        %1075 = vst.msk [vmem:[#allocation2 + $0x40] sm:$0xff] %vm1066, %v1041
        %1076 = vst.msk [vmem:[#allocation2 + $0x48] sm:$0xff] %vm1066, %v1043
        %1077 = vst.msk [vmem:[#allocation2 + $0x50] sm:$0xff] %vm1066, %v1045
        %1078 = vst.msk [vmem:[#allocation2 + $0x58] sm:$0xff] %vm1066, %v1047
        %1079 = vst.msk [vmem:[#allocation2 + $0x60] sm:$0xff] %vm1066, %v1049
        %1080 = vst.msk [vmem:[#allocation2 + $0x68] sm:$0xff] %vm1066, %v1051
        %s1081 = sadd.s32 %s186, 1
        %s1082 = smul.u32 %s1081, 3
        %s1083 = smul.addr %s1082, 4
        %s1084 = scalar_lea.vmem %s182, %s1083
        %v1085 = vld [vmem:[%s1084] sm:$0xf]
        %v1086 = vld [vmem:[%s1084 + $0x4] sm:$0xf]
        %v1087 = vld [vmem:[%s1084 + $0xc] sm:$0xf]
        %v1088 = vld [vmem:[%s1084 + $0x10] sm:$0xf]
        %v1089 = vld [vmem:[%s1084 + $0x18] sm:$0xf]
        %v1090 = vld [vmem:[%s1084 + $0x1c] sm:$0xf]
        %v1091 = vld [vmem:[%s1084 + $0x24] sm:$0xf]
        %v1092 = vld [vmem:[%s1084 + $0x28] sm:$0xf]
        %v1093 = vld [vmem:[%s1084 + $0x30] sm:$0xf]
        %v1094 = vld [vmem:[%s1084 + $0x34] sm:$0xf]
        %v1095 = vld [vmem:[%s1084 + $0x3c] sm:$0xf]
        %v1096 = vld [vmem:[%s1084 + $0x40] sm:$0xf]
        %v1097 = vld [vmem:[%s1084 + $0x48] sm:$0xf]
        %v1098 = vld [vmem:[%s1084 + $0x4c] sm:$0xf]
        %v1099 = vld [vmem:[%s1084 + $0x54] sm:$0xf]
        %v1100 = vld [vmem:[%s1084 + $0x58] sm:$0xf]
        %v1101 = vld [vmem:[%s1084 + $0x60] sm:$0xf]
        %v1102 = vld [vmem:[%s1084 + $0x64] sm:$0xf]
        %v1103 = vld [vmem:[%s1084 + $0x6c] sm:$0xf]
        %v1104 = vld [vmem:[%s1084 + $0x70] sm:$0xf]
        %v1105 = vld [vmem:[%s1084 + $0x78] sm:$0xf]
        %v1106 = vld [vmem:[%s1084 + $0x7c] sm:$0xf]
        %v1107 = vld [vmem:[%s1084 + $0x84] sm:$0xf]
        %v1108 = vld [vmem:[%s1084 + $0x88] sm:$0xf]
        %v1109 = vld [vmem:[%s1084 + $0x90] sm:$0xf]
        %v1110 = vld [vmem:[%s1084 + $0x94] sm:$0xf]
        %v1111 = vld [vmem:[%s1084 + $0x9c] sm:$0xf]
        %v1112 = vld [vmem:[%s1084 + $0xa0] sm:$0xf]
        %v1141 = vunpack.c.l.b16 %v1085
        %v1142 = vunpack.c.l.b16 %v1086
        %v1143 = vunpack.c.l.b16 %v1087
        %v1144 = vunpack.c.l.b16 %v1088
        %v1145 = vunpack.c.l.b16 %v1089
        %v1146 = vunpack.c.l.b16 %v1090
        %v1147 = vunpack.c.l.b16 %v1091
        %v1148 = vunpack.c.l.b16 %v1092
        %v1149 = vunpack.c.l.b16 %v1093
        %v1150 = vunpack.c.l.b16 %v1094
        %v1151 = vunpack.c.l.b16 %v1095
        %v1152 = vunpack.c.l.b16 %v1096
        %v1153 = vunpack.c.l.b16 %v1097
        %v1154 = vunpack.c.l.b16 %v1098
        %v1155 = vunpack.c.l.b16 %v1099
        %v1156 = vunpack.c.l.b16 %v1100
        %v1157 = vunpack.c.l.b16 %v1101
        %v1158 = vunpack.c.l.b16 %v1102
        %v1159 = vunpack.c.l.b16 %v1103
        %v1160 = vunpack.c.l.b16 %v1104
        %v1161 = vunpack.c.l.b16 %v1105
        %v1162 = vunpack.c.l.b16 %v1106
        %v1163 = vunpack.c.l.b16 %v1107
        %v1164 = vunpack.c.l.b16 %v1108
        %v1165 = vunpack.c.l.b16 %v1109
        %v1166 = vunpack.c.l.b16 %v1110
        %v1167 = vunpack.c.l.b16 %v1111
        %v1168 = vunpack.c.l.b16 %v1112
        %v1169 = vpack.c.b16 %v1142, %v1141
        %v1170 = vpack.c.b16 %v1144, %v1143
        %v1171 = vpack.c.b16 %v1146, %v1145
        %v1172 = vpack.c.b16 %v1148, %v1147
        %v1173 = vpack.c.b16 %v1150, %v1149
        %v1174 = vpack.c.b16 %v1152, %v1151
        %v1175 = vpack.c.b16 %v1154, %v1153
        %v1176 = vpack.c.b16 %v1156, %v1155
        %v1177 = vpack.c.b16 %v1158, %v1157
        %v1178 = vpack.c.b16 %v1160, %v1159
        %v1179 = vpack.c.b16 %v1162, %v1161
        %v1180 = vpack.c.b16 %v1164, %v1163
        %v1181 = vpack.c.b16 %v1166, %v1165
        %v1182 = vpack.c.b16 %v1168, %v1167
        %1183 = vrot.lane.b32.xlu0 %v1169, 24
        %v1184 = vpop.permute.xlu0 %1183
        %1185 = vrot.lane.b32.xlu0 %v1170, 24
        %v1186 = vpop.permute.xlu0 %1185
        %1187 = vrot.lane.b32.xlu0 %v1171, 24
        %v1188 = vpop.permute.xlu0 %1187
        %1189 = vrot.lane.b32.xlu0 %v1172, 24
        %v1190 = vpop.permute.xlu0 %1189
        %1191 = vrot.lane.b32.xlu0 %v1173, 24
        %v1192 = vpop.permute.xlu0 %1191
        %1193 = vrot.lane.b32.xlu0 %v1174, 24
        %v1194 = vpop.permute.xlu0 %1193
        %1195 = vrot.lane.b32.xlu0 %v1175, 24
        %v1196 = vpop.permute.xlu0 %1195
        %1197 = vrot.lane.b32.xlu0 %v1176, 24
        %v1198 = vpop.permute.xlu0 %1197
        %1199 = vrot.lane.b32.xlu0 %v1177, 24
        %v1200 = vpop.permute.xlu0 %1199
        %1201 = vrot.lane.b32.xlu0 %v1178, 24
        %v1202 = vpop.permute.xlu0 %1201
        %1203 = vrot.lane.b32.xlu0 %v1179, 24
        %v1204 = vpop.permute.xlu0 %1203
        %1205 = vrot.lane.b32.xlu0 %v1180, 24
        %v1206 = vpop.permute.xlu0 %1205
        %1207 = vrot.lane.b32.xlu0 %v1181, 24
        %v1208 = vpop.permute.xlu0 %1207
        %1209 = vrot.lane.b32.xlu0 %v1182, 24
        %v1210 = vpop.permute.xlu0 %1209
        %vm1225 = vcmask 261312
        %1226 = vst.msk [vmem:[#allocation2] sm:$0xff] %vm1225, %v1184
        %1227 = vst.msk [vmem:[#allocation2 + $0x8] sm:$0xff] %vm1225, %v1186
        %1228 = vst.msk [vmem:[#allocation2 + $0x10] sm:$0xff] %vm1225, %v1188
        %1229 = vst.msk [vmem:[#allocation2 + $0x18] sm:$0xff] %vm1225, %v1190
        %1230 = vst.msk [vmem:[#allocation2 + $0x20] sm:$0xff] %vm1225, %v1192
        %1231 = vst.msk [vmem:[#allocation2 + $0x28] sm:$0xff] %vm1225, %v1194
        %1232 = vst.msk [vmem:[#allocation2 + $0x30] sm:$0xff] %vm1225, %v1196
        %1233 = vst.msk [vmem:[#allocation2 + $0x38] sm:$0xff] %vm1225, %v1198
        %1234 = vst.msk [vmem:[#allocation2 + $0x40] sm:$0xff] %vm1225, %v1200
        %1235 = vst.msk [vmem:[#allocation2 + $0x48] sm:$0xff] %vm1225, %v1202
        %1236 = vst.msk [vmem:[#allocation2 + $0x50] sm:$0xff] %vm1225, %v1204
        %1237 = vst.msk [vmem:[#allocation2 + $0x58] sm:$0xff] %vm1225, %v1206
        %1238 = vst.msk [vmem:[#allocation2 + $0x60] sm:$0xff] %vm1225, %v1208
        %1239 = vst.msk [vmem:[#allocation2 + $0x68] sm:$0xff] %vm1225, %v1210
        %v1240 = vld [vmem:[%s1084] sm:$0xf]
        %v1241 = vld [vmem:[%s1084 + $0x4] sm:$0xf]
        %v1242 = vld [vmem:[%s1084 + $0x8] sm:$0x1]
        %v1243 = vld [vmem:[%s1084 + $0xc] sm:$0xf]
        %v1244 = vld [vmem:[%s1084 + $0x10] sm:$0xf]
        %v1245 = vld [vmem:[%s1084 + $0x14] sm:$0x1]
        %v1246 = vld [vmem:[%s1084 + $0x18] sm:$0xf]
        %v1247 = vld [vmem:[%s1084 + $0x1c] sm:$0xf]
        %v1248 = vld [vmem:[%s1084 + $0x20] sm:$0x1]
        %v1249 = vld [vmem:[%s1084 + $0x24] sm:$0xf]
        %v1250 = vld [vmem:[%s1084 + $0x28] sm:$0xf]
        %v1251 = vld [vmem:[%s1084 + $0x2c] sm:$0x1]
        %v1252 = vld [vmem:[%s1084 + $0x30] sm:$0xf]
        %v1253 = vld [vmem:[%s1084 + $0x34] sm:$0xf]
        %v1254 = vld [vmem:[%s1084 + $0x38] sm:$0x1]
        %v1255 = vld [vmem:[%s1084 + $0x3c] sm:$0xf]
        %v1256 = vld [vmem:[%s1084 + $0x40] sm:$0xf]
        %v1257 = vld [vmem:[%s1084 + $0x44] sm:$0x1]
        %v1258 = vld [vmem:[%s1084 + $0x48] sm:$0xf]
        %v1259 = vld [vmem:[%s1084 + $0x4c] sm:$0xf]
        %v1260 = vld [vmem:[%s1084 + $0x50] sm:$0x1]
        %v1261 = vld [vmem:[%s1084 + $0x54] sm:$0xf]
        %v1262 = vld [vmem:[%s1084 + $0x58] sm:$0xf]
        %v1263 = vld [vmem:[%s1084 + $0x5c] sm:$0x1]
        %v1264 = vld [vmem:[%s1084 + $0x60] sm:$0xf]
        %v1265 = vld [vmem:[%s1084 + $0x64] sm:$0xf]
        %v1266 = vld [vmem:[%s1084 + $0x68] sm:$0x1]
        %v1267 = vld [vmem:[%s1084 + $0x6c] sm:$0xf]
        %v1268 = vld [vmem:[%s1084 + $0x70] sm:$0xf]
        %v1269 = vld [vmem:[%s1084 + $0x74] sm:$0x1]
        %v1270 = vld [vmem:[%s1084 + $0x78] sm:$0xf]
        %v1271 = vld [vmem:[%s1084 + $0x7c] sm:$0xf]
        %v1272 = vld [vmem:[%s1084 + $0x80] sm:$0x1]
        %v1273 = vld [vmem:[%s1084 + $0x84] sm:$0xf]
        %v1274 = vld [vmem:[%s1084 + $0x88] sm:$0xf]
        %v1275 = vld [vmem:[%s1084 + $0x8c] sm:$0x1]
        %v1276 = vld [vmem:[%s1084 + $0x90] sm:$0xf]
        %v1277 = vld [vmem:[%s1084 + $0x94] sm:$0xf]
        %v1278 = vld [vmem:[%s1084 + $0x98] sm:$0x1]
        %v1279 = vld [vmem:[%s1084 + $0x9c] sm:$0xf]
        %v1280 = vld [vmem:[%s1084 + $0xa0] sm:$0xf]
        %v1281 = vld [vmem:[%s1084 + $0xa4] sm:$0x1]
        %v1283 = vshrl.u32 %v1240, 16
        %v1285 = vrot.slane %v1283, 4
        %v1286 = vshll.u32 %v1240, 16
        %v1288 = vrot.slane %v1286, 5
        %v1289 = vor.u32 %v1285, %v1288
        %v1290 = vrot.slane %v1289, 4
        %v1292 = vshll.u32 %v1241, 16
        %v1294 = vrot.slane %v1292, 5
        %v1295 = vsel %vm361, %v1290, %v1294
        %v1296 = vshrl.u32 %v1241, 16
        %v1298 = vrot.slane %v1296, 4
        %v1299 = vor.u32 %v1298, %v1294
        %v1300 = vrot.slane %v1299, 4
        %v1302 = vshll.u32 %v1242, 16
        %v1304 = vrot.slane %v1302, 5
        %v1305 = vsel %vm361, %v1300, %v1304
        %v1307 = vshrl.u32 %v1243, 16
        %v1309 = vrot.slane %v1307, 4
        %v1310 = vshll.u32 %v1243, 16
        %v1312 = vrot.slane %v1310, 5
        %v1313 = vor.u32 %v1309, %v1312
        %v1314 = vrot.slane %v1313, 4
        %v1316 = vshll.u32 %v1244, 16
        %v1318 = vrot.slane %v1316, 5
        %v1319 = vsel %vm361, %v1314, %v1318
        %v1320 = vshrl.u32 %v1244, 16
        %v1322 = vrot.slane %v1320, 4
        %v1323 = vor.u32 %v1322, %v1318
        %v1324 = vrot.slane %v1323, 4
        %v1326 = vshll.u32 %v1245, 16
        %v1328 = vrot.slane %v1326, 5
        %v1329 = vsel %vm361, %v1324, %v1328
        %v1331 = vshrl.u32 %v1246, 16
        %v1333 = vrot.slane %v1331, 4
        %v1334 = vshll.u32 %v1246, 16
        %v1336 = vrot.slane %v1334, 5
        %v1337 = vor.u32 %v1333, %v1336
        %v1338 = vrot.slane %v1337, 4
        %v1340 = vshll.u32 %v1247, 16
        %v1342 = vrot.slane %v1340, 5
        %v1343 = vsel %vm361, %v1338, %v1342
        %v1344 = vshrl.u32 %v1247, 16
        %v1346 = vrot.slane %v1344, 4
        %v1347 = vor.u32 %v1346, %v1342
        %v1348 = vrot.slane %v1347, 4
        %v1350 = vshll.u32 %v1248, 16
        %v1352 = vrot.slane %v1350, 5
        %v1353 = vsel %vm361, %v1348, %v1352
        %v1355 = vshrl.u32 %v1249, 16
        %v1357 = vrot.slane %v1355, 4
        %v1358 = vshll.u32 %v1249, 16
        %v1360 = vrot.slane %v1358, 5
        %v1361 = vor.u32 %v1357, %v1360
        %v1362 = vrot.slane %v1361, 4
        %v1364 = vshll.u32 %v1250, 16
        %v1366 = vrot.slane %v1364, 5
        %v1367 = vsel %vm361, %v1362, %v1366
        %v1368 = vshrl.u32 %v1250, 16
        %v1370 = vrot.slane %v1368, 4
        %v1371 = vor.u32 %v1370, %v1366
        %v1372 = vrot.slane %v1371, 4
        %v1374 = vshll.u32 %v1251, 16
        %v1376 = vrot.slane %v1374, 5
        %v1377 = vsel %vm361, %v1372, %v1376
        %v1379 = vshrl.u32 %v1252, 16
        %v1381 = vrot.slane %v1379, 4
        %v1382 = vshll.u32 %v1252, 16
        %v1384 = vrot.slane %v1382, 5
        %v1385 = vor.u32 %v1381, %v1384
        %v1386 = vrot.slane %v1385, 4
        %v1388 = vshll.u32 %v1253, 16
        %v1390 = vrot.slane %v1388, 5
        %v1391 = vsel %vm361, %v1386, %v1390
        %v1392 = vshrl.u32 %v1253, 16
        %v1394 = vrot.slane %v1392, 4
        %v1395 = vor.u32 %v1394, %v1390
        %v1396 = vrot.slane %v1395, 4
        %v1398 = vshll.u32 %v1254, 16
        %v1400 = vrot.slane %v1398, 5
        %v1401 = vsel %vm361, %v1396, %v1400
        %v1403 = vshrl.u32 %v1255, 16
        %v1405 = vrot.slane %v1403, 4
        %v1406 = vshll.u32 %v1255, 16
        %v1408 = vrot.slane %v1406, 5
        %v1409 = vor.u32 %v1405, %v1408
        %v1410 = vrot.slane %v1409, 4
        %v1412 = vshll.u32 %v1256, 16
        %v1414 = vrot.slane %v1412, 5
        %v1415 = vsel %vm361, %v1410, %v1414
        %v1416 = vshrl.u32 %v1256, 16
        %v1418 = vrot.slane %v1416, 4
        %v1419 = vor.u32 %v1418, %v1414
        %v1420 = vrot.slane %v1419, 4
        %v1422 = vshll.u32 %v1257, 16
        %v1424 = vrot.slane %v1422, 5
        %v1425 = vsel %vm361, %v1420, %v1424
        %v1427 = vshrl.u32 %v1258, 16
        %v1429 = vrot.slane %v1427, 4
        %v1430 = vshll.u32 %v1258, 16
        %v1432 = vrot.slane %v1430, 5
        %v1433 = vor.u32 %v1429, %v1432
        %v1434 = vrot.slane %v1433, 4
        %v1436 = vshll.u32 %v1259, 16
        %v1438 = vrot.slane %v1436, 5
        %v1439 = vsel %vm361, %v1434, %v1438
        %v1440 = vshrl.u32 %v1259, 16
        %v1442 = vrot.slane %v1440, 4
        %v1443 = vor.u32 %v1442, %v1438
        %v1444 = vrot.slane %v1443, 4
        %v1446 = vshll.u32 %v1260, 16
        %v1448 = vrot.slane %v1446, 5
        %v1449 = vsel %vm361, %v1444, %v1448
        %v1451 = vshrl.u32 %v1261, 16
        %v1453 = vrot.slane %v1451, 4
        %v1454 = vshll.u32 %v1261, 16
        %v1456 = vrot.slane %v1454, 5
        %v1457 = vor.u32 %v1453, %v1456
        %v1458 = vrot.slane %v1457, 4
        %v1460 = vshll.u32 %v1262, 16
        %v1462 = vrot.slane %v1460, 5
        %v1463 = vsel %vm361, %v1458, %v1462
        %v1464 = vshrl.u32 %v1262, 16
        %v1466 = vrot.slane %v1464, 4
        %v1467 = vor.u32 %v1466, %v1462
        %v1468 = vrot.slane %v1467, 4
        %v1470 = vshll.u32 %v1263, 16
        %v1472 = vrot.slane %v1470, 5
        %v1473 = vsel %vm361, %v1468, %v1472
        %v1475 = vshrl.u32 %v1264, 16
        %v1477 = vrot.slane %v1475, 4
        %v1478 = vshll.u32 %v1264, 16
        %v1480 = vrot.slane %v1478, 5
        %v1481 = vor.u32 %v1477, %v1480
        %v1482 = vrot.slane %v1481, 4
        %v1484 = vshll.u32 %v1265, 16
        %v1486 = vrot.slane %v1484, 5
        %v1487 = vsel %vm361, %v1482, %v1486
        %v1488 = vshrl.u32 %v1265, 16
        %v1490 = vrot.slane %v1488, 4
        %v1491 = vor.u32 %v1490, %v1486
        %v1492 = vrot.slane %v1491, 4
        %v1494 = vshll.u32 %v1266, 16
        %v1496 = vrot.slane %v1494, 5
        %v1497 = vsel %vm361, %v1492, %v1496
        %v1499 = vshrl.u32 %v1267, 16
        %v1501 = vrot.slane %v1499, 4
        %v1502 = vshll.u32 %v1267, 16
        %v1504 = vrot.slane %v1502, 5
        %v1505 = vor.u32 %v1501, %v1504
        %v1506 = vrot.slane %v1505, 4
        %v1508 = vshll.u32 %v1268, 16
        %v1510 = vrot.slane %v1508, 5
        %v1511 = vsel %vm361, %v1506, %v1510
        %v1512 = vshrl.u32 %v1268, 16
        %v1514 = vrot.slane %v1512, 4
        %v1515 = vor.u32 %v1514, %v1510
        %v1516 = vrot.slane %v1515, 4
        %v1518 = vshll.u32 %v1269, 16
        %v1520 = vrot.slane %v1518, 5
        %v1521 = vsel %vm361, %v1516, %v1520
        %v1523 = vshrl.u32 %v1270, 16
        %v1525 = vrot.slane %v1523, 4
        %v1526 = vshll.u32 %v1270, 16
        %v1528 = vrot.slane %v1526, 5
        %v1529 = vor.u32 %v1525, %v1528
        %v1530 = vrot.slane %v1529, 4
        %v1532 = vshll.u32 %v1271, 16
        %v1534 = vrot.slane %v1532, 5
        %v1535 = vsel %vm361, %v1530, %v1534
        %v1536 = vshrl.u32 %v1271, 16
        %v1538 = vrot.slane %v1536, 4
        %v1539 = vor.u32 %v1538, %v1534
        %v1540 = vrot.slane %v1539, 4
        %v1542 = vshll.u32 %v1272, 16
        %v1544 = vrot.slane %v1542, 5
        %v1545 = vsel %vm361, %v1540, %v1544
        %v1547 = vshrl.u32 %v1273, 16
        %v1549 = vrot.slane %v1547, 4
        %v1550 = vshll.u32 %v1273, 16
        %v1552 = vrot.slane %v1550, 5
        %v1553 = vor.u32 %v1549, %v1552
        %v1554 = vrot.slane %v1553, 4
        %v1556 = vshll.u32 %v1274, 16
        %v1558 = vrot.slane %v1556, 5
        %v1559 = vsel %vm361, %v1554, %v1558
        %v1560 = vshrl.u32 %v1274, 16
        %v1562 = vrot.slane %v1560, 4
        %v1563 = vor.u32 %v1562, %v1558
        %v1564 = vrot.slane %v1563, 4
        %v1566 = vshll.u32 %v1275, 16
        %v1568 = vrot.slane %v1566, 5
        %v1569 = vsel %vm361, %v1564, %v1568
        %v1571 = vshrl.u32 %v1276, 16
        %v1573 = vrot.slane %v1571, 4
        %v1574 = vshll.u32 %v1276, 16
        %v1576 = vrot.slane %v1574, 5
        %v1577 = vor.u32 %v1573, %v1576
        %v1578 = vrot.slane %v1577, 4
        %v1580 = vshll.u32 %v1277, 16
        %v1582 = vrot.slane %v1580, 5
        %v1583 = vsel %vm361, %v1578, %v1582
        %v1584 = vshrl.u32 %v1277, 16
        %v1586 = vrot.slane %v1584, 4
        %v1587 = vor.u32 %v1586, %v1582
        %v1588 = vrot.slane %v1587, 4
        %v1590 = vshll.u32 %v1278, 16
        %v1592 = vrot.slane %v1590, 5
        %v1593 = vsel %vm361, %v1588, %v1592
        %v1595 = vshrl.u32 %v1279, 16
        %v1597 = vrot.slane %v1595, 4
        %v1598 = vshll.u32 %v1279, 16
        %v1600 = vrot.slane %v1598, 5
        %v1601 = vor.u32 %v1597, %v1600
        %v1602 = vrot.slane %v1601, 4
        %v1604 = vshll.u32 %v1280, 16
        %v1606 = vrot.slane %v1604, 5
        %v1607 = vsel %vm361, %v1602, %v1606
        %v1608 = vshrl.u32 %v1280, 16
        %v1610 = vrot.slane %v1608, 4
        %v1611 = vor.u32 %v1610, %v1606
        %v1612 = vrot.slane %v1611, 4
        %v1614 = vshll.u32 %v1281, 16
        %v1616 = vrot.slane %v1614, 5
        %v1617 = vsel %vm361, %v1612, %v1616
        %v1618 = vunpack.c.l.b16 %v1295
        %v1619 = vunpack.c.l.b16 %v1305
        %v1620 = vunpack.c.l.b16 %v1319
        %v1621 = vunpack.c.l.b16 %v1329
        %v1622 = vunpack.c.l.b16 %v1343
        %v1623 = vunpack.c.l.b16 %v1353
        %v1624 = vunpack.c.l.b16 %v1367
        %v1625 = vunpack.c.l.b16 %v1377
        %v1626 = vunpack.c.l.b16 %v1391
        %v1627 = vunpack.c.l.b16 %v1401
        %v1628 = vunpack.c.l.b16 %v1415
        %v1629 = vunpack.c.l.b16 %v1425
        %v1630 = vunpack.c.l.b16 %v1439
        %v1631 = vunpack.c.l.b16 %v1449
        %v1632 = vunpack.c.l.b16 %v1463
        %v1633 = vunpack.c.l.b16 %v1473
        %v1634 = vunpack.c.l.b16 %v1487
        %v1635 = vunpack.c.l.b16 %v1497
        %v1636 = vunpack.c.l.b16 %v1511
        %v1637 = vunpack.c.l.b16 %v1521
        %v1638 = vunpack.c.l.b16 %v1535
        %v1639 = vunpack.c.l.b16 %v1545
        %v1640 = vunpack.c.l.b16 %v1559
        %v1641 = vunpack.c.l.b16 %v1569
        %v1642 = vunpack.c.l.b16 %v1583
        %v1643 = vunpack.c.l.b16 %v1593
        %v1644 = vunpack.c.l.b16 %v1607
        %v1645 = vunpack.c.l.b16 %v1617
        %v1646 = vpack.c.b16 %v1619, %v1618
        %v1647 = vpack.c.b16 %v1621, %v1620
        %v1648 = vpack.c.b16 %v1623, %v1622
        %v1649 = vpack.c.b16 %v1625, %v1624
        %v1650 = vpack.c.b16 %v1627, %v1626
        %v1651 = vpack.c.b16 %v1629, %v1628
        %v1652 = vpack.c.b16 %v1631, %v1630
        %v1653 = vpack.c.b16 %v1633, %v1632
        %v1654 = vpack.c.b16 %v1635, %v1634
        %v1655 = vpack.c.b16 %v1637, %v1636
        %v1656 = vpack.c.b16 %v1639, %v1638
        %v1657 = vpack.c.b16 %v1641, %v1640
        %v1658 = vpack.c.b16 %v1643, %v1642
        %v1659 = vpack.c.b16 %v1645, %v1644
        %1660 = vrot.lane.b32.xlu0 %v1646, 32
        %v1661 = vpop.permute.xlu0 %1660
        %1662 = vrot.lane.b32.xlu0 %v1647, 32
        %v1663 = vpop.permute.xlu0 %1662
        %1664 = vrot.lane.b32.xlu0 %v1648, 32
        %v1665 = vpop.permute.xlu0 %1664
        %1666 = vrot.lane.b32.xlu0 %v1649, 32
        %v1667 = vpop.permute.xlu0 %1666
        %1668 = vrot.lane.b32.xlu0 %v1650, 32
        %v1669 = vpop.permute.xlu0 %1668
        %1670 = vrot.lane.b32.xlu0 %v1651, 32
        %v1671 = vpop.permute.xlu0 %1670
        %1672 = vrot.lane.b32.xlu0 %v1652, 32
        %v1673 = vpop.permute.xlu0 %1672
        %1674 = vrot.lane.b32.xlu0 %v1653, 32
        %v1675 = vpop.permute.xlu0 %1674
        %1676 = vrot.lane.b32.xlu0 %v1654, 32
        %v1677 = vpop.permute.xlu0 %1676
        %1678 = vrot.lane.b32.xlu0 %v1655, 32
        %v1679 = vpop.permute.xlu0 %1678
        %1680 = vrot.lane.b32.xlu0 %v1656, 32
        %v1681 = vpop.permute.xlu0 %1680
        %1682 = vrot.lane.b32.xlu0 %v1657, 32
        %v1683 = vpop.permute.xlu0 %1682
        %1684 = vrot.lane.b32.xlu0 %v1658, 32
        %v1685 = vpop.permute.xlu0 %1684
        %1686 = vrot.lane.b32.xlu0 %v1659, 32
        %v1687 = vpop.permute.xlu0 %1686
        %vm1702 = vcmask 326912
        %1703 = vst.msk [vmem:[#allocation2] sm:$0xff] %vm1702, %v1661
        %1704 = vst.msk [vmem:[#allocation2 + $0x8] sm:$0xff] %vm1702, %v1663
        %1705 = vst.msk [vmem:[#allocation2 + $0x10] sm:$0xff] %vm1702, %v1665
        %1706 = vst.msk [vmem:[#allocation2 + $0x18] sm:$0xff] %vm1702, %v1667
        %1707 = vst.msk [vmem:[#allocation2 + $0x20] sm:$0xff] %vm1702, %v1669
        %1708 = vst.msk [vmem:[#allocation2 + $0x28] sm:$0xff] %vm1702, %v1671
        %1709 = vst.msk [vmem:[#allocation2 + $0x30] sm:$0xff] %vm1702, %v1673
        %1710 = vst.msk [vmem:[#allocation2 + $0x38] sm:$0xff] %vm1702, %v1675
        %1711 = vst.msk [vmem:[#allocation2 + $0x40] sm:$0xff] %vm1702, %v1677
        %1712 = vst.msk [vmem:[#allocation2 + $0x48] sm:$0xff] %vm1702, %v1679
        %1713 = vst.msk [vmem:[#allocation2 + $0x50] sm:$0xff] %vm1702, %v1681
        %1714 = vst.msk [vmem:[#allocation2 + $0x58] sm:$0xff] %vm1702, %v1683
        %1715 = vst.msk [vmem:[#allocation2 + $0x60] sm:$0xff] %vm1702, %v1685
        %1716 = vst.msk [vmem:[#allocation2 + $0x68] sm:$0xff] %vm1702, %v1687
        %v1717 = vld [vmem:[%s1084] sm:$0xe]
        %v1718 = vld [vmem:[%s1084 + $0x4] sm:$0xf]
        %v1719 = vld [vmem:[%s1084 + $0x8] sm:$0x1]
        %v1720 = vld [vmem:[%s1084 + $0xc] sm:$0xe]
        %v1721 = vld [vmem:[%s1084 + $0x10] sm:$0xf]
        %v1722 = vld [vmem:[%s1084 + $0x14] sm:$0x1]
        %v1723 = vld [vmem:[%s1084 + $0x18] sm:$0xe]
        %v1724 = vld [vmem:[%s1084 + $0x1c] sm:$0xf]
        %v1725 = vld [vmem:[%s1084 + $0x20] sm:$0x1]
        %v1726 = vld [vmem:[%s1084 + $0x24] sm:$0xe]
        %v1727 = vld [vmem:[%s1084 + $0x28] sm:$0xf]
        %v1728 = vld [vmem:[%s1084 + $0x2c] sm:$0x1]
        %v1729 = vld [vmem:[%s1084 + $0x30] sm:$0xe]
        %v1730 = vld [vmem:[%s1084 + $0x34] sm:$0xf]
        %v1731 = vld [vmem:[%s1084 + $0x38] sm:$0x1]
        %v1732 = vld [vmem:[%s1084 + $0x3c] sm:$0xe]
        %v1733 = vld [vmem:[%s1084 + $0x40] sm:$0xf]
        %v1734 = vld [vmem:[%s1084 + $0x44] sm:$0x1]
        %v1735 = vld [vmem:[%s1084 + $0x48] sm:$0xe]
        %v1736 = vld [vmem:[%s1084 + $0x4c] sm:$0xf]
        %v1737 = vld [vmem:[%s1084 + $0x50] sm:$0x1]
        %v1738 = vld [vmem:[%s1084 + $0x54] sm:$0xe]
        %v1739 = vld [vmem:[%s1084 + $0x58] sm:$0xf]
        %v1740 = vld [vmem:[%s1084 + $0x5c] sm:$0x1]
        %v1741 = vld [vmem:[%s1084 + $0x60] sm:$0xe]
        %v1742 = vld [vmem:[%s1084 + $0x64] sm:$0xf]
        %v1743 = vld [vmem:[%s1084 + $0x68] sm:$0x1]
        %v1744 = vld [vmem:[%s1084 + $0x6c] sm:$0xe]
        %v1745 = vld [vmem:[%s1084 + $0x70] sm:$0xf]
        %v1746 = vld [vmem:[%s1084 + $0x74] sm:$0x1]
        %v1747 = vld [vmem:[%s1084 + $0x78] sm:$0xe]
        %v1748 = vld [vmem:[%s1084 + $0x7c] sm:$0xf]
        %v1749 = vld [vmem:[%s1084 + $0x80] sm:$0x1]
        %v1750 = vld [vmem:[%s1084 + $0x84] sm:$0xe]
        %v1751 = vld [vmem:[%s1084 + $0x88] sm:$0xf]
        %v1752 = vld [vmem:[%s1084 + $0x8c] sm:$0x1]
        %v1753 = vld [vmem:[%s1084 + $0x90] sm:$0xe]
        %v1754 = vld [vmem:[%s1084 + $0x94] sm:$0xf]
        %v1755 = vld [vmem:[%s1084 + $0x98] sm:$0x1]
        %v1756 = vld [vmem:[%s1084 + $0x9c] sm:$0xe]
        %v1757 = vld [vmem:[%s1084 + $0xa0] sm:$0xf]
        %v1758 = vld [vmem:[%s1084 + $0xa4] sm:$0x1]
        %v1801 = vrot.slane %v1717, 5
        %v1802 = vrot.slane %v1801, 4
        %v1803 = vrot.slane %v1718, 5
        %v1804 = vsel %vm883, %v1802, %v1803
        %v1805 = vrot.slane %v1803, 4
        %v1806 = vrot.slane %v1719, 5
        %v1807 = vsel %vm883, %v1805, %v1806
        %v1808 = vrot.slane %v1720, 5
        %v1809 = vrot.slane %v1808, 4
        %v1810 = vrot.slane %v1721, 5
        %v1811 = vsel %vm883, %v1809, %v1810
        %v1812 = vrot.slane %v1810, 4
        %v1813 = vrot.slane %v1722, 5
        %v1814 = vsel %vm883, %v1812, %v1813
        %v1815 = vrot.slane %v1723, 5
        %v1816 = vrot.slane %v1815, 4
        %v1817 = vrot.slane %v1724, 5
        %v1818 = vsel %vm883, %v1816, %v1817
        %v1819 = vrot.slane %v1817, 4
        %v1820 = vrot.slane %v1725, 5
        %v1821 = vsel %vm883, %v1819, %v1820
        %v1822 = vrot.slane %v1726, 5
        %v1823 = vrot.slane %v1822, 4
        %v1824 = vrot.slane %v1727, 5
        %v1825 = vsel %vm883, %v1823, %v1824
        %v1826 = vrot.slane %v1824, 4
        %v1827 = vrot.slane %v1728, 5
        %v1828 = vsel %vm883, %v1826, %v1827
        %v1829 = vrot.slane %v1729, 5
        %v1830 = vrot.slane %v1829, 4
        %v1831 = vrot.slane %v1730, 5
        %v1832 = vsel %vm883, %v1830, %v1831
        %v1833 = vrot.slane %v1831, 4
        %v1834 = vrot.slane %v1731, 5
        %v1835 = vsel %vm883, %v1833, %v1834
        %v1836 = vrot.slane %v1732, 5
        %v1837 = vrot.slane %v1836, 4
        %v1838 = vrot.slane %v1733, 5
        %v1839 = vsel %vm883, %v1837, %v1838
        %v1840 = vrot.slane %v1838, 4
        %v1841 = vrot.slane %v1734, 5
        %v1842 = vsel %vm883, %v1840, %v1841
        %v1843 = vrot.slane %v1735, 5
        %v1844 = vrot.slane %v1843, 4
        %v1845 = vrot.slane %v1736, 5
        %v1846 = vsel %vm883, %v1844, %v1845
        %v1847 = vrot.slane %v1845, 4
        %v1848 = vrot.slane %v1737, 5
        %v1849 = vsel %vm883, %v1847, %v1848
        %v1850 = vrot.slane %v1738, 5
        %v1851 = vrot.slane %v1850, 4
        %v1852 = vrot.slane %v1739, 5
        %v1853 = vsel %vm883, %v1851, %v1852
        %v1854 = vrot.slane %v1852, 4
        %v1855 = vrot.slane %v1740, 5
        %v1856 = vsel %vm883, %v1854, %v1855
        %v1857 = vrot.slane %v1741, 5
        %v1858 = vrot.slane %v1857, 4
        %v1859 = vrot.slane %v1742, 5
        %v1860 = vsel %vm883, %v1858, %v1859
        %v1861 = vrot.slane %v1859, 4
        %v1862 = vrot.slane %v1743, 5
        %v1863 = vsel %vm883, %v1861, %v1862
        %v1864 = vrot.slane %v1744, 5
        %v1865 = vrot.slane %v1864, 4
        %v1866 = vrot.slane %v1745, 5
        %v1867 = vsel %vm883, %v1865, %v1866
        %v1868 = vrot.slane %v1866, 4
        %v1869 = vrot.slane %v1746, 5
        %v1870 = vsel %vm883, %v1868, %v1869
        %v1871 = vrot.slane %v1747, 5
        %v1872 = vrot.slane %v1871, 4
        %v1873 = vrot.slane %v1748, 5
        %v1874 = vsel %vm883, %v1872, %v1873
        %v1875 = vrot.slane %v1873, 4
        %v1876 = vrot.slane %v1749, 5
        %v1877 = vsel %vm883, %v1875, %v1876
        %v1878 = vrot.slane %v1750, 5
        %v1879 = vrot.slane %v1878, 4
        %v1880 = vrot.slane %v1751, 5
        %v1881 = vsel %vm883, %v1879, %v1880
        %v1882 = vrot.slane %v1880, 4
        %v1883 = vrot.slane %v1752, 5
        %v1884 = vsel %vm883, %v1882, %v1883
        %v1885 = vrot.slane %v1753, 5
        %v1886 = vrot.slane %v1885, 4
        %v1887 = vrot.slane %v1754, 5
        %v1888 = vsel %vm883, %v1886, %v1887
        %v1889 = vrot.slane %v1887, 4
        %v1890 = vrot.slane %v1755, 5
        %v1891 = vsel %vm883, %v1889, %v1890
        %v1892 = vrot.slane %v1756, 5
        %v1893 = vrot.slane %v1892, 4
        %v1894 = vrot.slane %v1757, 5
        %v1895 = vsel %vm883, %v1893, %v1894
        %v1896 = vrot.slane %v1894, 4
        %v1897 = vrot.slane %v1758, 5
        %v1898 = vsel %vm883, %v1896, %v1897
        %v1899 = vunpack.c.l.b16 %v1804
        %v1900 = vunpack.c.l.b16 %v1807
        %v1901 = vunpack.c.l.b16 %v1811
        %v1902 = vunpack.c.l.b16 %v1814
        %v1903 = vunpack.c.l.b16 %v1818
        %v1904 = vunpack.c.l.b16 %v1821
        %v1905 = vunpack.c.l.b16 %v1825
        %v1906 = vunpack.c.l.b16 %v1828
        %v1907 = vunpack.c.l.b16 %v1832
        %v1908 = vunpack.c.l.b16 %v1835
        %v1909 = vunpack.c.l.b16 %v1839
        %v1910 = vunpack.c.l.b16 %v1842
        %v1911 = vunpack.c.l.b16 %v1846
        %v1912 = vunpack.c.l.b16 %v1849
        %v1913 = vunpack.c.l.b16 %v1853
        %v1914 = vunpack.c.l.b16 %v1856
        %v1915 = vunpack.c.l.b16 %v1860
        %v1916 = vunpack.c.l.b16 %v1863
        %v1917 = vunpack.c.l.b16 %v1867
        %v1918 = vunpack.c.l.b16 %v1870
        %v1919 = vunpack.c.l.b16 %v1874
        %v1920 = vunpack.c.l.b16 %v1877
        %v1921 = vunpack.c.l.b16 %v1881
        %v1922 = vunpack.c.l.b16 %v1884
        %v1923 = vunpack.c.l.b16 %v1888
        %v1924 = vunpack.c.l.b16 %v1891
        %v1925 = vunpack.c.l.b16 %v1895
        %v1926 = vunpack.c.l.b16 %v1898
        %v1927 = vpack.c.b16 %v1900, %v1899
        %v1928 = vpack.c.b16 %v1902, %v1901
        %v1929 = vpack.c.b16 %v1904, %v1903
        %v1930 = vpack.c.b16 %v1906, %v1905
        %v1931 = vpack.c.b16 %v1908, %v1907
        %v1932 = vpack.c.b16 %v1910, %v1909
        %v1933 = vpack.c.b16 %v1912, %v1911
        %v1934 = vpack.c.b16 %v1914, %v1913
        %v1935 = vpack.c.b16 %v1916, %v1915
        %v1936 = vpack.c.b16 %v1918, %v1917
        %v1937 = vpack.c.b16 %v1920, %v1919
        %v1938 = vpack.c.b16 %v1922, %v1921
        %v1939 = vpack.c.b16 %v1924, %v1923
        %v1940 = vpack.c.b16 %v1926, %v1925
        %1941 = vrot.lane.b32.xlu0 %v1927, 40
        %v1942 = vpop.permute.xlu0 %1941
        %1943 = vrot.lane.b32.xlu0 %v1928, 40
        %v1944 = vpop.permute.xlu0 %1943
        %1945 = vrot.lane.b32.xlu0 %v1929, 40
        %v1946 = vpop.permute.xlu0 %1945
        %1947 = vrot.lane.b32.xlu0 %v1930, 40
        %v1948 = vpop.permute.xlu0 %1947
        %1949 = vrot.lane.b32.xlu0 %v1931, 40
        %v1950 = vpop.permute.xlu0 %1949
        %1951 = vrot.lane.b32.xlu0 %v1932, 40
        %v1952 = vpop.permute.xlu0 %1951
        %1953 = vrot.lane.b32.xlu0 %v1933, 40
        %v1954 = vpop.permute.xlu0 %1953
        %1955 = vrot.lane.b32.xlu0 %v1934, 40
        %v1956 = vpop.permute.xlu0 %1955
        %1957 = vrot.lane.b32.xlu0 %v1935, 40
        %v1958 = vpop.permute.xlu0 %1957
        %1959 = vrot.lane.b32.xlu0 %v1936, 40
        %v1960 = vpop.permute.xlu0 %1959
        %1961 = vrot.lane.b32.xlu0 %v1937, 40
        %v1962 = vpop.permute.xlu0 %1961
        %1963 = vrot.lane.b32.xlu0 %v1938, 40
        %v1964 = vpop.permute.xlu0 %1963
        %1965 = vrot.lane.b32.xlu0 %v1939, 40
        %v1966 = vpop.permute.xlu0 %1965
        %1967 = vrot.lane.b32.xlu0 %v1940, 40
        %v1968 = vpop.permute.xlu0 %1967
        %vm1983 = vcmask 392512
        %1984 = vst.msk [vmem:[#allocation2] sm:$0xff] %vm1983, %v1942
        %1985 = vst.msk [vmem:[#allocation2 + $0x8] sm:$0xff] %vm1983, %v1944
        %1986 = vst.msk [vmem:[#allocation2 + $0x10] sm:$0xff] %vm1983, %v1946
        %1987 = vst.msk [vmem:[#allocation2 + $0x18] sm:$0xff] %vm1983, %v1948
        %1988 = vst.msk [vmem:[#allocation2 + $0x20] sm:$0xff] %vm1983, %v1950
        %1989 = vst.msk [vmem:[#allocation2 + $0x28] sm:$0xff] %vm1983, %v1952
        %1990 = vst.msk [vmem:[#allocation2 + $0x30] sm:$0xff] %vm1983, %v1954
        %1991 = vst.msk [vmem:[#allocation2 + $0x38] sm:$0xff] %vm1983, %v1956
        %1992 = vst.msk [vmem:[#allocation2 + $0x40] sm:$0xff] %vm1983, %v1958
        %1993 = vst.msk [vmem:[#allocation2 + $0x48] sm:$0xff] %vm1983, %v1960
        %1994 = vst.msk [vmem:[#allocation2 + $0x50] sm:$0xff] %vm1983, %v1962
        %1995 = vst.msk [vmem:[#allocation2 + $0x58] sm:$0xff] %vm1983, %v1964
        %1996 = vst.msk [vmem:[#allocation2 + $0x60] sm:$0xff] %vm1983, %v1966
        %1997 = vst.msk [vmem:[#allocation2 + $0x68] sm:$0xff] %vm1983, %v1968
        %s1998 = sadd.s32 %s186, 2
        %s1999 = smul.u32 %s1998, 3
        %s2000 = smul.addr %s1999, 4
        %s2001 = scalar_lea.vmem %s182, %s2000
        %v2002 = vld [vmem:[%s2001] sm:$0xf]
        %v2003 = vld [vmem:[%s2001 + $0x4] sm:$0xf]
        %v2004 = vld [vmem:[%s2001 + $0xc] sm:$0xf]
        %v2005 = vld [vmem:[%s2001 + $0x10] sm:$0xf]
        %v2006 = vld [vmem:[%s2001 + $0x18] sm:$0xf]
        %v2007 = vld [vmem:[%s2001 + $0x1c] sm:$0xf]
        %v2008 = vld [vmem:[%s2001 + $0x24] sm:$0xf]
        %v2009 = vld [vmem:[%s2001 + $0x28] sm:$0xf]
        %v2010 = vld [vmem:[%s2001 + $0x30] sm:$0xf]
        %v2011 = vld [vmem:[%s2001 + $0x34] sm:$0xf]
        %v2012 = vld [vmem:[%s2001 + $0x3c] sm:$0xf]
        %v2013 = vld [vmem:[%s2001 + $0x40] sm:$0xf]
        %v2014 = vld [vmem:[%s2001 + $0x48] sm:$0xf]
        %v2015 = vld [vmem:[%s2001 + $0x4c] sm:$0xf]
        %v2016 = vld [vmem:[%s2001 + $0x54] sm:$0xf]
        %v2017 = vld [vmem:[%s2001 + $0x58] sm:$0xf]
        %v2018 = vld [vmem:[%s2001 + $0x60] sm:$0xf]
        %v2019 = vld [vmem:[%s2001 + $0x64] sm:$0xf]
        %v2020 = vld [vmem:[%s2001 + $0x6c] sm:$0xf]
        %v2021 = vld [vmem:[%s2001 + $0x70] sm:$0xf]
        %v2022 = vld [vmem:[%s2001 + $0x78] sm:$0xf]
        %v2023 = vld [vmem:[%s2001 + $0x7c] sm:$0xf]
        %v2024 = vld [vmem:[%s2001 + $0x84] sm:$0xf]
        %v2025 = vld [vmem:[%s2001 + $0x88] sm:$0xf]
        %v2026 = vld [vmem:[%s2001 + $0x90] sm:$0xf]
        %v2027 = vld [vmem:[%s2001 + $0x94] sm:$0xf]
        %v2028 = vld [vmem:[%s2001 + $0x9c] sm:$0xf]
        %v2029 = vld [vmem:[%s2001 + $0xa0] sm:$0xf]
        %v2058 = vunpack.c.l.b16 %v2002
        %v2059 = vunpack.c.l.b16 %v2003
        %v2060 = vunpack.c.l.b16 %v2004
        %v2061 = vunpack.c.l.b16 %v2005
        %v2062 = vunpack.c.l.b16 %v2006
        %v2063 = vunpack.c.l.b16 %v2007
        %v2064 = vunpack.c.l.b16 %v2008
        %v2065 = vunpack.c.l.b16 %v2009
        %v2066 = vunpack.c.l.b16 %v2010
        %v2067 = vunpack.c.l.b16 %v2011
        %v2068 = vunpack.c.l.b16 %v2012
        %v2069 = vunpack.c.l.b16 %v2013
        %v2070 = vunpack.c.l.b16 %v2014
        %v2071 = vunpack.c.l.b16 %v2015
        %v2072 = vunpack.c.l.b16 %v2016
        %v2073 = vunpack.c.l.b16 %v2017
        %v2074 = vunpack.c.l.b16 %v2018
        %v2075 = vunpack.c.l.b16 %v2019
        %v2076 = vunpack.c.l.b16 %v2020
        %v2077 = vunpack.c.l.b16 %v2021
        %v2078 = vunpack.c.l.b16 %v2022
        %v2079 = vunpack.c.l.b16 %v2023
        %v2080 = vunpack.c.l.b16 %v2024
        %v2081 = vunpack.c.l.b16 %v2025
        %v2082 = vunpack.c.l.b16 %v2026
        %v2083 = vunpack.c.l.b16 %v2027
        %v2084 = vunpack.c.l.b16 %v2028
        %v2085 = vunpack.c.l.b16 %v2029
        %v2086 = vpack.c.b16 %v2059, %v2058
        %v2087 = vpack.c.b16 %v2061, %v2060
        %v2088 = vpack.c.b16 %v2063, %v2062
        %v2089 = vpack.c.b16 %v2065, %v2064
        %v2090 = vpack.c.b16 %v2067, %v2066
        %v2091 = vpack.c.b16 %v2069, %v2068
        %v2092 = vpack.c.b16 %v2071, %v2070
        %v2093 = vpack.c.b16 %v2073, %v2072
        %v2094 = vpack.c.b16 %v2075, %v2074
        %v2095 = vpack.c.b16 %v2077, %v2076
        %v2096 = vpack.c.b16 %v2079, %v2078
        %v2097 = vpack.c.b16 %v2081, %v2080
        %v2098 = vpack.c.b16 %v2083, %v2082
        %v2099 = vpack.c.b16 %v2085, %v2084
        %2100 = vrot.lane.b32.xlu0 %v2086, 48
        %v2101 = vpop.permute.xlu0 %2100
        %2102 = vrot.lane.b32.xlu0 %v2087, 48
        %v2103 = vpop.permute.xlu0 %2102
        %2104 = vrot.lane.b32.xlu0 %v2088, 48
        %v2105 = vpop.permute.xlu0 %2104
        %2106 = vrot.lane.b32.xlu0 %v2089, 48
        %v2107 = vpop.permute.xlu0 %2106
        %2108 = vrot.lane.b32.xlu0 %v2090, 48
        %v2109 = vpop.permute.xlu0 %2108
        %2110 = vrot.lane.b32.xlu0 %v2091, 48
        %v2111 = vpop.permute.xlu0 %2110
        %2112 = vrot.lane.b32.xlu0 %v2092, 48
        %v2113 = vpop.permute.xlu0 %2112
        %2114 = vrot.lane.b32.xlu0 %v2093, 48
        %v2115 = vpop.permute.xlu0 %2114
        %2116 = vrot.lane.b32.xlu0 %v2094, 48
        %v2117 = vpop.permute.xlu0 %2116
        %2118 = vrot.lane.b32.xlu0 %v2095, 48
        %v2119 = vpop.permute.xlu0 %2118
        %2120 = vrot.lane.b32.xlu0 %v2096, 48
        %v2121 = vpop.permute.xlu0 %2120
        %2122 = vrot.lane.b32.xlu0 %v2097, 48
        %v2123 = vpop.permute.xlu0 %2122
        %2124 = vrot.lane.b32.xlu0 %v2098, 48
        %v2125 = vpop.permute.xlu0 %2124
        %2126 = vrot.lane.b32.xlu0 %v2099, 48
        %v2127 = vpop.permute.xlu0 %2126
        %vm2142 = vcmask 458112
        %2143 = vst.msk [vmem:[#allocation2] sm:$0xff] %vm2142, %v2101
        %2144 = vst.msk [vmem:[#allocation2 + $0x8] sm:$0xff] %vm2142, %v2103
        %2145 = vst.msk [vmem:[#allocation2 + $0x10] sm:$0xff] %vm2142, %v2105
        %2146 = vst.msk [vmem:[#allocation2 + $0x18] sm:$0xff] %vm2142, %v2107
        %2147 = vst.msk [vmem:[#allocation2 + $0x20] sm:$0xff] %vm2142, %v2109
        %2148 = vst.msk [vmem:[#allocation2 + $0x28] sm:$0xff] %vm2142, %v2111
        %2149 = vst.msk [vmem:[#allocation2 + $0x30] sm:$0xff] %vm2142, %v2113
        %2150 = vst.msk [vmem:[#allocation2 + $0x38] sm:$0xff] %vm2142, %v2115
        %2151 = vst.msk [vmem:[#allocation2 + $0x40] sm:$0xff] %vm2142, %v2117
        %2152 = vst.msk [vmem:[#allocation2 + $0x48] sm:$0xff] %vm2142, %v2119
        %2153 = vst.msk [vmem:[#allocation2 + $0x50] sm:$0xff] %vm2142, %v2121
        %2154 = vst.msk [vmem:[#allocation2 + $0x58] sm:$0xff] %vm2142, %v2123
        %2155 = vst.msk [vmem:[#allocation2 + $0x60] sm:$0xff] %vm2142, %v2125
        %2156 = vst.msk [vmem:[#allocation2 + $0x68] sm:$0xff] %vm2142, %v2127
        %v2157 = vld [vmem:[%s2001] sm:$0xf]
        %v2158 = vld [vmem:[%s2001 + $0x4] sm:$0xf]
        %v2159 = vld [vmem:[%s2001 + $0x8] sm:$0x1]
        %v2160 = vld [vmem:[%s2001 + $0xc] sm:$0xf]
        %v2161 = vld [vmem:[%s2001 + $0x10] sm:$0xf]
        %v2162 = vld [vmem:[%s2001 + $0x14] sm:$0x1]
        %v2163 = vld [vmem:[%s2001 + $0x18] sm:$0xf]
        %v2164 = vld [vmem:[%s2001 + $0x1c] sm:$0xf]
        %v2165 = vld [vmem:[%s2001 + $0x20] sm:$0x1]
        %v2166 = vld [vmem:[%s2001 + $0x24] sm:$0xf]
        %v2167 = vld [vmem:[%s2001 + $0x28] sm:$0xf]
        %v2168 = vld [vmem:[%s2001 + $0x2c] sm:$0x1]
        %v2169 = vld [vmem:[%s2001 + $0x30] sm:$0xf]
        %v2170 = vld [vmem:[%s2001 + $0x34] sm:$0xf]
        %v2171 = vld [vmem:[%s2001 + $0x38] sm:$0x1]
        %v2172 = vld [vmem:[%s2001 + $0x3c] sm:$0xf]
        %v2173 = vld [vmem:[%s2001 + $0x40] sm:$0xf]
        %v2174 = vld [vmem:[%s2001 + $0x44] sm:$0x1]
        %v2175 = vld [vmem:[%s2001 + $0x48] sm:$0xf]
        %v2176 = vld [vmem:[%s2001 + $0x4c] sm:$0xf]
        %v2177 = vld [vmem:[%s2001 + $0x50] sm:$0x1]
        %v2178 = vld [vmem:[%s2001 + $0x54] sm:$0xf]
        %v2179 = vld [vmem:[%s2001 + $0x58] sm:$0xf]
        %v2180 = vld [vmem:[%s2001 + $0x5c] sm:$0x1]
        %v2181 = vld [vmem:[%s2001 + $0x60] sm:$0xf]
        %v2182 = vld [vmem:[%s2001 + $0x64] sm:$0xf]
        %v2183 = vld [vmem:[%s2001 + $0x68] sm:$0x1]
        %v2184 = vld [vmem:[%s2001 + $0x6c] sm:$0xf]
        %v2185 = vld [vmem:[%s2001 + $0x70] sm:$0xf]
        %v2186 = vld [vmem:[%s2001 + $0x74] sm:$0x1]
        %v2187 = vld [vmem:[%s2001 + $0x78] sm:$0xf]
        %v2188 = vld [vmem:[%s2001 + $0x7c] sm:$0xf]
        %v2189 = vld [vmem:[%s2001 + $0x80] sm:$0x1]
        %v2190 = vld [vmem:[%s2001 + $0x84] sm:$0xf]
        %v2191 = vld [vmem:[%s2001 + $0x88] sm:$0xf]
        %v2192 = vld [vmem:[%s2001 + $0x8c] sm:$0x1]
        %v2193 = vld [vmem:[%s2001 + $0x90] sm:$0xf]
        %v2194 = vld [vmem:[%s2001 + $0x94] sm:$0xf]
        %v2195 = vld [vmem:[%s2001 + $0x98] sm:$0x1]
        %v2196 = vld [vmem:[%s2001 + $0x9c] sm:$0xf]
        %v2197 = vld [vmem:[%s2001 + $0xa0] sm:$0xf]
        %v2198 = vld [vmem:[%s2001 + $0xa4] sm:$0x1]
        %v2200 = vshrl.u32 %v2157, 16
        %v2202 = vrot.slane %v2200, 4
        %v2203 = vshll.u32 %v2157, 16
        %v2205 = vrot.slane %v2203, 5
        %v2206 = vor.u32 %v2202, %v2205
        %v2207 = vrot.slane %v2206, 4
        %v2209 = vshll.u32 %v2158, 16
        %v2211 = vrot.slane %v2209, 5
        %v2212 = vsel %vm361, %v2207, %v2211
        %v2213 = vshrl.u32 %v2158, 16
        %v2215 = vrot.slane %v2213, 4
        %v2216 = vor.u32 %v2215, %v2211
        %v2217 = vrot.slane %v2216, 4
        %v2219 = vshll.u32 %v2159, 16
        %v2221 = vrot.slane %v2219, 5
        %v2222 = vsel %vm361, %v2217, %v2221
        %v2224 = vshrl.u32 %v2160, 16
        %v2226 = vrot.slane %v2224, 4
        %v2227 = vshll.u32 %v2160, 16
        %v2229 = vrot.slane %v2227, 5
        %v2230 = vor.u32 %v2226, %v2229
        %v2231 = vrot.slane %v2230, 4
        %v2233 = vshll.u32 %v2161, 16
        %v2235 = vrot.slane %v2233, 5
        %v2236 = vsel %vm361, %v2231, %v2235
        %v2237 = vshrl.u32 %v2161, 16
        %v2239 = vrot.slane %v2237, 4
        %v2240 = vor.u32 %v2239, %v2235
        %v2241 = vrot.slane %v2240, 4
        %v2243 = vshll.u32 %v2162, 16
        %v2245 = vrot.slane %v2243, 5
        %v2246 = vsel %vm361, %v2241, %v2245
        %v2248 = vshrl.u32 %v2163, 16
        %v2250 = vrot.slane %v2248, 4
        %v2251 = vshll.u32 %v2163, 16
        %v2253 = vrot.slane %v2251, 5
        %v2254 = vor.u32 %v2250, %v2253
        %v2255 = vrot.slane %v2254, 4
        %v2257 = vshll.u32 %v2164, 16
        %v2259 = vrot.slane %v2257, 5
        %v2260 = vsel %vm361, %v2255, %v2259
        %v2261 = vshrl.u32 %v2164, 16
        %v2263 = vrot.slane %v2261, 4
        %v2264 = vor.u32 %v2263, %v2259
        %v2265 = vrot.slane %v2264, 4
        %v2267 = vshll.u32 %v2165, 16
        %v2269 = vrot.slane %v2267, 5
        %v2270 = vsel %vm361, %v2265, %v2269
        %v2272 = vshrl.u32 %v2166, 16
        %v2274 = vrot.slane %v2272, 4
        %v2275 = vshll.u32 %v2166, 16
        %v2277 = vrot.slane %v2275, 5
        %v2278 = vor.u32 %v2274, %v2277
        %v2279 = vrot.slane %v2278, 4
        %v2281 = vshll.u32 %v2167, 16
        %v2283 = vrot.slane %v2281, 5
        %v2284 = vsel %vm361, %v2279, %v2283
        %v2285 = vshrl.u32 %v2167, 16
        %v2287 = vrot.slane %v2285, 4
        %v2288 = vor.u32 %v2287, %v2283
        %v2289 = vrot.slane %v2288, 4
        %v2291 = vshll.u32 %v2168, 16
        %v2293 = vrot.slane %v2291, 5
        %v2294 = vsel %vm361, %v2289, %v2293
        %v2296 = vshrl.u32 %v2169, 16
        %v2298 = vrot.slane %v2296, 4
        %v2299 = vshll.u32 %v2169, 16
        %v2301 = vrot.slane %v2299, 5
        %v2302 = vor.u32 %v2298, %v2301
        %v2303 = vrot.slane %v2302, 4
        %v2305 = vshll.u32 %v2170, 16
        %v2307 = vrot.slane %v2305, 5
        %v2308 = vsel %vm361, %v2303, %v2307
        %v2309 = vshrl.u32 %v2170, 16
        %v2311 = vrot.slane %v2309, 4
        %v2312 = vor.u32 %v2311, %v2307
        %v2313 = vrot.slane %v2312, 4
        %v2315 = vshll.u32 %v2171, 16
        %v2317 = vrot.slane %v2315, 5
        %v2318 = vsel %vm361, %v2313, %v2317
        %v2320 = vshrl.u32 %v2172, 16
        %v2322 = vrot.slane %v2320, 4
        %v2323 = vshll.u32 %v2172, 16
        %v2325 = vrot.slane %v2323, 5
        %v2326 = vor.u32 %v2322, %v2325
        %v2327 = vrot.slane %v2326, 4
        %v2329 = vshll.u32 %v2173, 16
        %v2331 = vrot.slane %v2329, 5
        %v2332 = vsel %vm361, %v2327, %v2331
        %v2333 = vshrl.u32 %v2173, 16
        %v2335 = vrot.slane %v2333, 4
        %v2336 = vor.u32 %v2335, %v2331
        %v2337 = vrot.slane %v2336, 4
        %v2339 = vshll.u32 %v2174, 16
        %v2341 = vrot.slane %v2339, 5
        %v2342 = vsel %vm361, %v2337, %v2341
        %v2344 = vshrl.u32 %v2175, 16
        %v2346 = vrot.slane %v2344, 4
        %v2347 = vshll.u32 %v2175, 16
        %v2349 = vrot.slane %v2347, 5
        %v2350 = vor.u32 %v2346, %v2349
        %v2351 = vrot.slane %v2350, 4
        %v2353 = vshll.u32 %v2176, 16
        %v2355 = vrot.slane %v2353, 5
        %v2356 = vsel %vm361, %v2351, %v2355
        %v2357 = vshrl.u32 %v2176, 16
        %v2359 = vrot.slane %v2357, 4
        %v2360 = vor.u32 %v2359, %v2355
        %v2361 = vrot.slane %v2360, 4
        %v2363 = vshll.u32 %v2177, 16
        %v2365 = vrot.slane %v2363, 5
        %v2366 = vsel %vm361, %v2361, %v2365
        %v2368 = vshrl.u32 %v2178, 16
        %v2370 = vrot.slane %v2368, 4
        %v2371 = vshll.u32 %v2178, 16
        %v2373 = vrot.slane %v2371, 5
        %v2374 = vor.u32 %v2370, %v2373
        %v2375 = vrot.slane %v2374, 4
        %v2377 = vshll.u32 %v2179, 16
        %v2379 = vrot.slane %v2377, 5
        %v2380 = vsel %vm361, %v2375, %v2379
        %v2381 = vshrl.u32 %v2179, 16
        %v2383 = vrot.slane %v2381, 4
        %v2384 = vor.u32 %v2383, %v2379
        %v2385 = vrot.slane %v2384, 4
        %v2387 = vshll.u32 %v2180, 16
        %v2389 = vrot.slane %v2387, 5
        %v2390 = vsel %vm361, %v2385, %v2389
        %v2392 = vshrl.u32 %v2181, 16
        %v2394 = vrot.slane %v2392, 4
        %v2395 = vshll.u32 %v2181, 16
        %v2397 = vrot.slane %v2395, 5
        %v2398 = vor.u32 %v2394, %v2397
        %v2399 = vrot.slane %v2398, 4
        %v2401 = vshll.u32 %v2182, 16
        %v2403 = vrot.slane %v2401, 5
        %v2404 = vsel %vm361, %v2399, %v2403
        %v2405 = vshrl.u32 %v2182, 16
        %v2407 = vrot.slane %v2405, 4
        %v2408 = vor.u32 %v2407, %v2403
        %v2409 = vrot.slane %v2408, 4
        %v2411 = vshll.u32 %v2183, 16
        %v2413 = vrot.slane %v2411, 5
        %v2414 = vsel %vm361, %v2409, %v2413
        %v2416 = vshrl.u32 %v2184, 16
        %v2418 = vrot.slane %v2416, 4
        %v2419 = vshll.u32 %v2184, 16
        %v2421 = vrot.slane %v2419, 5
        %v2422 = vor.u32 %v2418, %v2421
        %v2423 = vrot.slane %v2422, 4
        %v2425 = vshll.u32 %v2185, 16
        %v2427 = vrot.slane %v2425, 5
        %v2428 = vsel %vm361, %v2423, %v2427
        %v2429 = vshrl.u32 %v2185, 16
        %v2431 = vrot.slane %v2429, 4
        %v2432 = vor.u32 %v2431, %v2427
        %v2433 = vrot.slane %v2432, 4
        %v2435 = vshll.u32 %v2186, 16
        %v2437 = vrot.slane %v2435, 5
        %v2438 = vsel %vm361, %v2433, %v2437
        %v2440 = vshrl.u32 %v2187, 16
        %v2442 = vrot.slane %v2440, 4
        %v2443 = vshll.u32 %v2187, 16
        %v2445 = vrot.slane %v2443, 5
        %v2446 = vor.u32 %v2442, %v2445
        %v2447 = vrot.slane %v2446, 4
        %v2449 = vshll.u32 %v2188, 16
        %v2451 = vrot.slane %v2449, 5
        %v2452 = vsel %vm361, %v2447, %v2451
        %v2453 = vshrl.u32 %v2188, 16
        %v2455 = vrot.slane %v2453, 4
        %v2456 = vor.u32 %v2455, %v2451
        %v2457 = vrot.slane %v2456, 4
        %v2459 = vshll.u32 %v2189, 16
        %v2461 = vrot.slane %v2459, 5
        %v2462 = vsel %vm361, %v2457, %v2461
        %v2464 = vshrl.u32 %v2190, 16
        %v2466 = vrot.slane %v2464, 4
        %v2467 = vshll.u32 %v2190, 16
        %v2469 = vrot.slane %v2467, 5
        %v2470 = vor.u32 %v2466, %v2469
        %v2471 = vrot.slane %v2470, 4
        %v2473 = vshll.u32 %v2191, 16
        %v2475 = vrot.slane %v2473, 5
        %v2476 = vsel %vm361, %v2471, %v2475
        %v2477 = vshrl.u32 %v2191, 16
        %v2479 = vrot.slane %v2477, 4
        %v2480 = vor.u32 %v2479, %v2475
        %v2481 = vrot.slane %v2480, 4
        %v2483 = vshll.u32 %v2192, 16
        %v2485 = vrot.slane %v2483, 5
        %v2486 = vsel %vm361, %v2481, %v2485
        %v2488 = vshrl.u32 %v2193, 16
        %v2490 = vrot.slane %v2488, 4
        %v2491 = vshll.u32 %v2193, 16
        %v2493 = vrot.slane %v2491, 5
        %v2494 = vor.u32 %v2490, %v2493
        %v2495 = vrot.slane %v2494, 4
        %v2497 = vshll.u32 %v2194, 16
        %v2499 = vrot.slane %v2497, 5
        %v2500 = vsel %vm361, %v2495, %v2499
        %v2501 = vshrl.u32 %v2194, 16
        %v2503 = vrot.slane %v2501, 4
        %v2504 = vor.u32 %v2503, %v2499
        %v2505 = vrot.slane %v2504, 4
        %v2507 = vshll.u32 %v2195, 16
        %v2509 = vrot.slane %v2507, 5
        %v2510 = vsel %vm361, %v2505, %v2509
        %v2512 = vshrl.u32 %v2196, 16
        %v2514 = vrot.slane %v2512, 4
        %v2515 = vshll.u32 %v2196, 16
        %v2517 = vrot.slane %v2515, 5
        %v2518 = vor.u32 %v2514, %v2517
        %v2519 = vrot.slane %v2518, 4
        %v2521 = vshll.u32 %v2197, 16
        %v2523 = vrot.slane %v2521, 5
        %v2524 = vsel %vm361, %v2519, %v2523
        %v2525 = vshrl.u32 %v2197, 16
        %v2527 = vrot.slane %v2525, 4
        %v2528 = vor.u32 %v2527, %v2523
        %v2529 = vrot.slane %v2528, 4
        %v2531 = vshll.u32 %v2198, 16
        %v2533 = vrot.slane %v2531, 5
        %v2534 = vsel %vm361, %v2529, %v2533
        %v2535 = vunpack.c.l.b16 %v2212
        %v2536 = vunpack.c.l.b16 %v2222
        %v2537 = vunpack.c.l.b16 %v2236
        %v2538 = vunpack.c.l.b16 %v2246
        %v2539 = vunpack.c.l.b16 %v2260
        %v2540 = vunpack.c.l.b16 %v2270
        %v2541 = vunpack.c.l.b16 %v2284
        %v2542 = vunpack.c.l.b16 %v2294
        %v2543 = vunpack.c.l.b16 %v2308
        %v2544 = vunpack.c.l.b16 %v2318
        %v2545 = vunpack.c.l.b16 %v2332
        %v2546 = vunpack.c.l.b16 %v2342
        %v2547 = vunpack.c.l.b16 %v2356
        %v2548 = vunpack.c.l.b16 %v2366
        %v2549 = vunpack.c.l.b16 %v2380
        %v2550 = vunpack.c.l.b16 %v2390
        %v2551 = vunpack.c.l.b16 %v2404
        %v2552 = vunpack.c.l.b16 %v2414
        %v2553 = vunpack.c.l.b16 %v2428
        %v2554 = vunpack.c.l.b16 %v2438
        %v2555 = vunpack.c.l.b16 %v2452
        %v2556 = vunpack.c.l.b16 %v2462
        %v2557 = vunpack.c.l.b16 %v2476
        %v2558 = vunpack.c.l.b16 %v2486
        %v2559 = vunpack.c.l.b16 %v2500
        %v2560 = vunpack.c.l.b16 %v2510
        %v2561 = vunpack.c.l.b16 %v2524
        %v2562 = vunpack.c.l.b16 %v2534
        %v2563 = vpack.c.b16 %v2536, %v2535
        %v2564 = vpack.c.b16 %v2538, %v2537
        %v2565 = vpack.c.b16 %v2540, %v2539
        %v2566 = vpack.c.b16 %v2542, %v2541
        %v2567 = vpack.c.b16 %v2544, %v2543
        %v2568 = vpack.c.b16 %v2546, %v2545
        %v2569 = vpack.c.b16 %v2548, %v2547
        %v2570 = vpack.c.b16 %v2550, %v2549
        %v2571 = vpack.c.b16 %v2552, %v2551
        %v2572 = vpack.c.b16 %v2554, %v2553
        %v2573 = vpack.c.b16 %v2556, %v2555
        %v2574 = vpack.c.b16 %v2558, %v2557
        %v2575 = vpack.c.b16 %v2560, %v2559
        %v2576 = vpack.c.b16 %v2562, %v2561
        %2577 = vrot.lane.b32.xlu0 %v2563, 56
        %v2578 = vpop.permute.xlu0 %2577
        %2579 = vrot.lane.b32.xlu0 %v2564, 56
        %v2580 = vpop.permute.xlu0 %2579
        %2581 = vrot.lane.b32.xlu0 %v2565, 56
        %v2582 = vpop.permute.xlu0 %2581
        %2583 = vrot.lane.b32.xlu0 %v2566, 56
        %v2584 = vpop.permute.xlu0 %2583
        %2585 = vrot.lane.b32.xlu0 %v2567, 56
        %v2586 = vpop.permute.xlu0 %2585
        %2587 = vrot.lane.b32.xlu0 %v2568, 56
        %v2588 = vpop.permute.xlu0 %2587
        %2589 = vrot.lane.b32.xlu0 %v2569, 56
        %v2590 = vpop.permute.xlu0 %2589
        %2591 = vrot.lane.b32.xlu0 %v2570, 56
        %v2592 = vpop.permute.xlu0 %2591
        %2593 = vrot.lane.b32.xlu0 %v2571, 56
        %v2594 = vpop.permute.xlu0 %2593
        %2595 = vrot.lane.b32.xlu0 %v2572, 56
        %v2596 = vpop.permute.xlu0 %2595
        %2597 = vrot.lane.b32.xlu0 %v2573, 56
        %v2598 = vpop.permute.xlu0 %2597
        %2599 = vrot.lane.b32.xlu0 %v2574, 56
        %v2600 = vpop.permute.xlu0 %2599
        %2601 = vrot.lane.b32.xlu0 %v2575, 56
        %v2602 = vpop.permute.xlu0 %2601
        %2603 = vrot.lane.b32.xlu0 %v2576, 56
        %v2604 = vpop.permute.xlu0 %2603
        %vm2619 = vcmask 523712
        %2620 = vst.msk [vmem:[#allocation2] sm:$0xff] %vm2619, %v2578
        %2621 = vst.msk [vmem:[#allocation2 + $0x8] sm:$0xff] %vm2619, %v2580
        %2622 = vst.msk [vmem:[#allocation2 + $0x10] sm:$0xff] %vm2619, %v2582
        %2623 = vst.msk [vmem:[#allocation2 + $0x18] sm:$0xff] %vm2619, %v2584
        %2624 = vst.msk [vmem:[#allocation2 + $0x20] sm:$0xff] %vm2619, %v2586
        %2625 = vst.msk [vmem:[#allocation2 + $0x28] sm:$0xff] %vm2619, %v2588
        %2626 = vst.msk [vmem:[#allocation2 + $0x30] sm:$0xff] %vm2619, %v2590
        %2627 = vst.msk [vmem:[#allocation2 + $0x38] sm:$0xff] %vm2619, %v2592
        %2628 = vst.msk [vmem:[#allocation2 + $0x40] sm:$0xff] %vm2619, %v2594
        %2629 = vst.msk [vmem:[#allocation2 + $0x48] sm:$0xff] %vm2619, %v2596
        %2630 = vst.msk [vmem:[#allocation2 + $0x50] sm:$0xff] %vm2619, %v2598
        %2631 = vst.msk [vmem:[#allocation2 + $0x58] sm:$0xff] %vm2619, %v2600
        %2632 = vst.msk [vmem:[#allocation2 + $0x60] sm:$0xff] %vm2619, %v2602
        %2633 = vst.msk [vmem:[#allocation2 + $0x68] sm:$0xff] %vm2619, %v2604
        %v2634 = vld [vmem:[%s2001] sm:$0xe]
        %v2635 = vld [vmem:[%s2001 + $0x4] sm:$0xf]
        %v2636 = vld [vmem:[%s2001 + $0x8] sm:$0x1]
        %v2637 = vld [vmem:[%s2001 + $0xc] sm:$0xe]
        %v2638 = vld [vmem:[%s2001 + $0x10] sm:$0xf]
        %v2639 = vld [vmem:[%s2001 + $0x14] sm:$0x1]
        %v2640 = vld [vmem:[%s2001 + $0x18] sm:$0xe]
        %v2641 = vld [vmem:[%s2001 + $0x1c] sm:$0xf]
        %v2642 = vld [vmem:[%s2001 + $0x20] sm:$0x1]
        %v2643 = vld [vmem:[%s2001 + $0x24] sm:$0xe]
        %v2644 = vld [vmem:[%s2001 + $0x28] sm:$0xf]
        %v2645 = vld [vmem:[%s2001 + $0x2c] sm:$0x1]
        %v2646 = vld [vmem:[%s2001 + $0x30] sm:$0xe]
        %v2647 = vld [vmem:[%s2001 + $0x34] sm:$0xf]
        %v2648 = vld [vmem:[%s2001 + $0x38] sm:$0x1]
        %v2649 = vld [vmem:[%s2001 + $0x3c] sm:$0xe]
        %v2650 = vld [vmem:[%s2001 + $0x40] sm:$0xf]
        %v2651 = vld [vmem:[%s2001 + $0x44] sm:$0x1]
        %v2652 = vld [vmem:[%s2001 + $0x48] sm:$0xe]
        %v2653 = vld [vmem:[%s2001 + $0x4c] sm:$0xf]
        %v2654 = vld [vmem:[%s2001 + $0x50] sm:$0x1]
        %v2655 = vld [vmem:[%s2001 + $0x54] sm:$0xe]
        %v2656 = vld [vmem:[%s2001 + $0x58] sm:$0xf]
        %v2657 = vld [vmem:[%s2001 + $0x5c] sm:$0x1]
        %v2658 = vld [vmem:[%s2001 + $0x60] sm:$0xe]
        %v2659 = vld [vmem:[%s2001 + $0x64] sm:$0xf]
        %v2660 = vld [vmem:[%s2001 + $0x68] sm:$0x1]
        %v2661 = vld [vmem:[%s2001 + $0x6c] sm:$0xe]
        %v2662 = vld [vmem:[%s2001 + $0x70] sm:$0xf]
        %v2663 = vld [vmem:[%s2001 + $0x74] sm:$0x1]
        %v2664 = vld [vmem:[%s2001 + $0x78] sm:$0xe]
        %v2665 = vld [vmem:[%s2001 + $0x7c] sm:$0xf]
        %v2666 = vld [vmem:[%s2001 + $0x80] sm:$0x1]
        %v2667 = vld [vmem:[%s2001 + $0x84] sm:$0xe]
        %v2668 = vld [vmem:[%s2001 + $0x88] sm:$0xf]
        %v2669 = vld [vmem:[%s2001 + $0x8c] sm:$0x1]
        %v2670 = vld [vmem:[%s2001 + $0x90] sm:$0xe]
        %v2671 = vld [vmem:[%s2001 + $0x94] sm:$0xf]
        %v2672 = vld [vmem:[%s2001 + $0x98] sm:$0x1]
        %v2673 = vld [vmem:[%s2001 + $0x9c] sm:$0xe]
        %v2674 = vld [vmem:[%s2001 + $0xa0] sm:$0xf]
        %v2675 = vld [vmem:[%s2001 + $0xa4] sm:$0x1]
        %v2718 = vrot.slane %v2634, 5
        %v2719 = vrot.slane %v2718, 4
        %v2720 = vrot.slane %v2635, 5
        %v2721 = vsel %vm883, %v2719, %v2720
        %v2722 = vrot.slane %v2720, 4
        %v2723 = vrot.slane %v2636, 5
        %v2724 = vsel %vm883, %v2722, %v2723
        %v2725 = vrot.slane %v2637, 5
        %v2726 = vrot.slane %v2725, 4
        %v2727 = vrot.slane %v2638, 5
        %v2728 = vsel %vm883, %v2726, %v2727
        %v2729 = vrot.slane %v2727, 4
        %v2730 = vrot.slane %v2639, 5
        %v2731 = vsel %vm883, %v2729, %v2730
        %v2732 = vrot.slane %v2640, 5
        %v2733 = vrot.slane %v2732, 4
        %v2734 = vrot.slane %v2641, 5
        %v2735 = vsel %vm883, %v2733, %v2734
        %v2736 = vrot.slane %v2734, 4
        %v2737 = vrot.slane %v2642, 5
        %v2738 = vsel %vm883, %v2736, %v2737
        %v2739 = vrot.slane %v2643, 5
        %v2740 = vrot.slane %v2739, 4
        %v2741 = vrot.slane %v2644, 5
        %v2742 = vsel %vm883, %v2740, %v2741
        %v2743 = vrot.slane %v2741, 4
        %v2744 = vrot.slane %v2645, 5
        %v2745 = vsel %vm883, %v2743, %v2744
        %v2746 = vrot.slane %v2646, 5
        %v2747 = vrot.slane %v2746, 4
        %v2748 = vrot.slane %v2647, 5
        %v2749 = vsel %vm883, %v2747, %v2748
        %v2750 = vrot.slane %v2748, 4
        %v2751 = vrot.slane %v2648, 5
        %v2752 = vsel %vm883, %v2750, %v2751
        %v2753 = vrot.slane %v2649, 5
        %v2754 = vrot.slane %v2753, 4
        %v2755 = vrot.slane %v2650, 5
        %v2756 = vsel %vm883, %v2754, %v2755
        %v2757 = vrot.slane %v2755, 4
        %v2758 = vrot.slane %v2651, 5
        %v2759 = vsel %vm883, %v2757, %v2758
        %v2760 = vrot.slane %v2652, 5
        %v2761 = vrot.slane %v2760, 4
        %v2762 = vrot.slane %v2653, 5
        %v2763 = vsel %vm883, %v2761, %v2762
        %v2764 = vrot.slane %v2762, 4
        %v2765 = vrot.slane %v2654, 5
        %v2766 = vsel %vm883, %v2764, %v2765
        %v2767 = vrot.slane %v2655, 5
        %v2768 = vrot.slane %v2767, 4
        %v2769 = vrot.slane %v2656, 5
        %v2770 = vsel %vm883, %v2768, %v2769
        %v2771 = vrot.slane %v2769, 4
        %v2772 = vrot.slane %v2657, 5
        %v2773 = vsel %vm883, %v2771, %v2772
        %v2774 = vrot.slane %v2658, 5
        %v2775 = vrot.slane %v2774, 4
        %v2776 = vrot.slane %v2659, 5
        %v2777 = vsel %vm883, %v2775, %v2776
        %v2778 = vrot.slane %v2776, 4
        %v2779 = vrot.slane %v2660, 5
        %v2780 = vsel %vm883, %v2778, %v2779
        %v2781 = vrot.slane %v2661, 5
        %v2782 = vrot.slane %v2781, 4
        %v2783 = vrot.slane %v2662, 5
        %v2784 = vsel %vm883, %v2782, %v2783
        %v2785 = vrot.slane %v2783, 4
        %v2786 = vrot.slane %v2663, 5
        %v2787 = vsel %vm883, %v2785, %v2786
        %v2788 = vrot.slane %v2664, 5
        %v2789 = vrot.slane %v2788, 4
        %v2790 = vrot.slane %v2665, 5
        %v2791 = vsel %vm883, %v2789, %v2790
        %v2792 = vrot.slane %v2790, 4
        %v2793 = vrot.slane %v2666, 5
        %v2794 = vsel %vm883, %v2792, %v2793
        %v2795 = vrot.slane %v2667, 5
        %v2796 = vrot.slane %v2795, 4
        %v2797 = vrot.slane %v2668, 5
        %v2798 = vsel %vm883, %v2796, %v2797
        %v2799 = vrot.slane %v2797, 4
        %v2800 = vrot.slane %v2669, 5
        %v2801 = vsel %vm883, %v2799, %v2800
        %v2802 = vrot.slane %v2670, 5
        %v2803 = vrot.slane %v2802, 4
        %v2804 = vrot.slane %v2671, 5
        %v2805 = vsel %vm883, %v2803, %v2804
        %v2806 = vrot.slane %v2804, 4
        %v2807 = vrot.slane %v2672, 5
        %v2808 = vsel %vm883, %v2806, %v2807
        %v2809 = vrot.slane %v2673, 5
        %v2810 = vrot.slane %v2809, 4
        %v2811 = vrot.slane %v2674, 5
        %v2812 = vsel %vm883, %v2810, %v2811
        %v2813 = vrot.slane %v2811, 4
        %v2814 = vrot.slane %v2675, 5
        %v2815 = vsel %vm883, %v2813, %v2814
        %v2816 = vunpack.c.l.b16 %v2721
        %v2817 = vunpack.c.l.b16 %v2724
        %v2818 = vunpack.c.l.b16 %v2728
        %v2819 = vunpack.c.l.b16 %v2731
        %v2820 = vunpack.c.l.b16 %v2735
        %v2821 = vunpack.c.l.b16 %v2738
        %v2822 = vunpack.c.l.b16 %v2742
        %v2823 = vunpack.c.l.b16 %v2745
        %v2824 = vunpack.c.l.b16 %v2749
        %v2825 = vunpack.c.l.b16 %v2752
        %v2826 = vunpack.c.l.b16 %v2756
        %v2827 = vunpack.c.l.b16 %v2759
        %v2828 = vunpack.c.l.b16 %v2763
        %v2829 = vunpack.c.l.b16 %v2766
        %v2830 = vunpack.c.l.b16 %v2770
        %v2831 = vunpack.c.l.b16 %v2773
        %v2832 = vunpack.c.l.b16 %v2777
        %v2833 = vunpack.c.l.b16 %v2780
        %v2834 = vunpack.c.l.b16 %v2784
        %v2835 = vunpack.c.l.b16 %v2787
        %v2836 = vunpack.c.l.b16 %v2791
        %v2837 = vunpack.c.l.b16 %v2794
        %v2838 = vunpack.c.l.b16 %v2798
        %v2839 = vunpack.c.l.b16 %v2801
        %v2840 = vunpack.c.l.b16 %v2805
        %v2841 = vunpack.c.l.b16 %v2808
        %v2842 = vunpack.c.l.b16 %v2812
        %v2843 = vunpack.c.l.b16 %v2815
        %v2844 = vpack.c.b16 %v2817, %v2816
        %v2845 = vpack.c.b16 %v2819, %v2818
        %v2846 = vpack.c.b16 %v2821, %v2820
        %v2847 = vpack.c.b16 %v2823, %v2822
        %v2848 = vpack.c.b16 %v2825, %v2824
        %v2849 = vpack.c.b16 %v2827, %v2826
        %v2850 = vpack.c.b16 %v2829, %v2828
        %v2851 = vpack.c.b16 %v2831, %v2830
        %v2852 = vpack.c.b16 %v2833, %v2832
        %v2853 = vpack.c.b16 %v2835, %v2834
        %v2854 = vpack.c.b16 %v2837, %v2836
        %v2855 = vpack.c.b16 %v2839, %v2838
        %v2856 = vpack.c.b16 %v2841, %v2840
        %v2857 = vpack.c.b16 %v2843, %v2842
        %2858 = vrot.lane.b32.xlu0 %v2844, 64
        %v2859 = vpop.permute.xlu0 %2858
        %2860 = vrot.lane.b32.xlu0 %v2845, 64
        %v2861 = vpop.permute.xlu0 %2860
        %2862 = vrot.lane.b32.xlu0 %v2846, 64
        %v2863 = vpop.permute.xlu0 %2862
        %2864 = vrot.lane.b32.xlu0 %v2847, 64
        %v2865 = vpop.permute.xlu0 %2864
        %2866 = vrot.lane.b32.xlu0 %v2848, 64
        %v2867 = vpop.permute.xlu0 %2866
        %2868 = vrot.lane.b32.xlu0 %v2849, 64
        %v2869 = vpop.permute.xlu0 %2868
        %2870 = vrot.lane.b32.xlu0 %v2850, 64
        %v2871 = vpop.permute.xlu0 %2870
        %2872 = vrot.lane.b32.xlu0 %v2851, 64
        %v2873 = vpop.permute.xlu0 %2872
        %2874 = vrot.lane.b32.xlu0 %v2852, 64
        %v2875 = vpop.permute.xlu0 %2874
        %2876 = vrot.lane.b32.xlu0 %v2853, 64
        %v2877 = vpop.permute.xlu0 %2876
        %2878 = vrot.lane.b32.xlu0 %v2854, 64
        %v2879 = vpop.permute.xlu0 %2878
        %2880 = vrot.lane.b32.xlu0 %v2855, 64
        %v2881 = vpop.permute.xlu0 %2880
        %2882 = vrot.lane.b32.xlu0 %v2856, 64
        %v2883 = vpop.permute.xlu0 %2882
        %2884 = vrot.lane.b32.xlu0 %v2857, 64
        %v2885 = vpop.permute.xlu0 %2884
        %vm2900 = vcmask 589312
        %2901 = vst.msk [vmem:[#allocation2] sm:$0xff] %vm2900, %v2859
        %2902 = vst.msk [vmem:[#allocation2 + $0x8] sm:$0xff] %vm2900, %v2861
        %2903 = vst.msk [vmem:[#allocation2 + $0x10] sm:$0xff] %vm2900, %v2863
        %2904 = vst.msk [vmem:[#allocation2 + $0x18] sm:$0xff] %vm2900, %v2865
        %2905 = vst.msk [vmem:[#allocation2 + $0x20] sm:$0xff] %vm2900, %v2867
        %2906 = vst.msk [vmem:[#allocation2 + $0x28] sm:$0xff] %vm2900, %v2869
        %2907 = vst.msk [vmem:[#allocation2 + $0x30] sm:$0xff] %vm2900, %v2871
        %2908 = vst.msk [vmem:[#allocation2 + $0x38] sm:$0xff] %vm2900, %v2873
        %2909 = vst.msk [vmem:[#allocation2 + $0x40] sm:$0xff] %vm2900, %v2875
        %2910 = vst.msk [vmem:[#allocation2 + $0x48] sm:$0xff] %vm2900, %v2877
        %2911 = vst.msk [vmem:[#allocation2 + $0x50] sm:$0xff] %vm2900, %v2879
        %2912 = vst.msk [vmem:[#allocation2 + $0x58] sm:$0xff] %vm2900, %v2881
        %2913 = vst.msk [vmem:[#allocation2 + $0x60] sm:$0xff] %vm2900, %v2883
        %2914 = vst.msk [vmem:[#allocation2 + $0x68] sm:$0xff] %vm2900, %v2885
        %v2915 = vld [vmem:[#allocation2] sm:$0xff]
        %v2916 = vld [vmem:[#allocation2 + $0x8] sm:$0xff]
        %v2917 = vld [vmem:[#allocation2 + $0x10] sm:$0xff]
        %v2918 = vld [vmem:[#allocation2 + $0x18] sm:$0xff]
        %v2919 = vld [vmem:[#allocation2 + $0x20] sm:$0xff]
        %v2920 = vld [vmem:[#allocation2 + $0x28] sm:$0xff]
        %v2921 = vld [vmem:[#allocation2 + $0x30] sm:$0xff]
        %v2922 = vld [vmem:[#allocation2 + $0x38] sm:$0xff]
        %v2923 = vld [vmem:[#allocation2 + $0x40] sm:$0xff]
        %v2924 = vld [vmem:[#allocation2 + $0x48] sm:$0xff]
        %v2925 = vld [vmem:[#allocation2 + $0x50] sm:$0xff]
        %v2926 = vld [vmem:[#allocation2 + $0x58] sm:$0xff]
        %v2927 = vld [vmem:[#allocation2 + $0x60] sm:$0xff]
        %v2928 = vld [vmem:[#allocation2 + $0x68] sm:$0xff]
        %v2929 = vld [vmem:[%s1] sm:$0xf]
        %v2930 = vld [vmem:[%s1 + $0x4] sm:$0xf]
        %v2931 = vld [vmem:[%s1 + $0x8] sm:$0xf]
        %v2932 = vld [vmem:[%s1 + $0xc] sm:$0xf]
        %v2933 = vld [vmem:[%s1 + $0x10] sm:$0xf]
        %v2934 = vld [vmem:[%s1 + $0x14] sm:$0xf]
        %v2935 = vld [vmem:[%s1 + $0x18] sm:$0xf]
        %v2936 = vld [vmem:[%s1 + $0x1c] sm:$0xf]
        %v2937 = vld [vmem:[%s1 + $0x20] sm:$0xf]
        %v2938 = vld [vmem:[%s2] sm:$0x1]
        %v2940 = vlaneseq
        %v2941 = vshrl.u32 %v2940, 7
        %v2942 = vsub.s32 0, %v2941
        %v2943 = vrot.slane %v2938, %v2942
        %v2954 = vunpack.c.l.b16 %v2929
        %v2955 = vunpack.c.l.b16 %v2930
        %v2956 = vunpack.c.l.b16 %v2931
        %v2957 = vunpack.c.l.b16 %v2932
        %v2958 = vunpack.c.l.b16 %v2933
        %v2959 = vunpack.c.l.b16 %v2934
        %v2960 = vunpack.c.l.b16 %v2935
        %v2961 = vunpack.c.l.b16 %v2936
        %v2962 = vunpack.c.l.b16 %v2937
        %v2963 = vpack.c.b16 %v2955, %v2954
        %v2964 = vpack.c.b16 %v2957, %v2956
        %v2965 = vpack.c.b16 %v2959, %v2958
        %v2966 = vpack.c.b16 %v2961, %v2960
        %v2967 = vpack.c.b16 %v2962, %v2962
        %vm2972 = vcmask 588800
        %v2974 = vsel %vm2972, %v2915, 0
        %v2977 = vsel %vm2972, %v2916, 0
        %v2980 = vsel %vm2972, %v2917, 0
        %v2983 = vsel %vm2972, %v2918, 0
        %v2986 = vsel %vm2972, %v2919, 0
        %v2989 = vsel %vm2972, %v2920, 0
        %v2992 = vsel %vm2972, %v2921, 0
        %v2995 = vsel %vm2972, %v2922, 0
        %v2998 = vsel %vm2972, %v2923, 0
        %v3001 = vsel %vm2972, %v2924, 0
        %v3004 = vsel %vm2972, %v2925, 0
        %v3007 = vsel %vm2972, %v2926, 0
        %v3010 = vsel %vm2972, %v2927, 0
        %v3013 = vsel %vm2972, %v2928, 0
        %vm3015 = vcmask 1043456
        %v3017 = vsel %vm3015, %v2967, 0
        %3019 = vmatprep.subr.bf16.mxu0 0
        %3020 = vmatpush1.bf16.msra.mxu0 %v2963
        %3021 = vmatprep.subr.bf16.mxu0 0
        %3022 = vmatpush1.bf16.msra.mxu0 %v2964
        %3023 = vmatprep.subr.bf16.mxu0 0
        %3024 = vmatpush1.bf16.msra.mxu0 %v2965
        %3025 = vmatprep.subr.bf16.mxu0 0
        %3026 = vmatpush1.bf16.msra.mxu0 %v2966
        %3027 = vmatprep.subr.bf16.mxu0 0
        %3028 = vmatpush1.bf16.msra.mxu0 %v3017
        %3029 = vmatprep.subr.bf16.mxu0 0
        %3030 = vmatpush1.bf16.msra.mxu0 0
        %3031 = vmatprep.subr.bf16.mxu0 0
        %3032 = vmatpush1.bf16.msra.mxu0 0
        %3033 = vmatprep.subr.bf16.mxu0 0
        %3034 = vmatpush1.bf16.msra.mxu0 0
        %3035 = vmatprep.subr.bf16.mxu0 0
        %3036 = vmatpush1.bf16.msra.mxu0 0
        %3037 = vmatprep.subr.bf16.mxu0 0
        %3038 = vmatpush1.bf16.msra.mxu0 0
        %3039 = vmatprep.subr.bf16.mxu0 0
        %3040 = vmatpush1.bf16.msra.mxu0 0
        %3041 = vmatprep.subr.bf16.mxu0 0
        %3042 = vmatpush1.bf16.msra.mxu0 0
        %3043 = vmatprep.subr.bf16.mxu0 0
        %3044 = vmatpush1.bf16.msra.mxu0 0
        %3045 = vmatprep.subr.bf16.mxu0 0
        %3046 = vmatpush1.bf16.msra.mxu0 0
        %3047 = vmatprep.subr.bf16.mxu0 0
        %3048 = vmatpush1.bf16.msra.mxu0 0
        %3049 = vmatprep.subr.bf16.mxu0 0
        %3050 = vmatpush1.bf16.msra.mxu0 0
        %3051 = vmatprep.mubr.bf16.mxu0 0
        %3052 = vmatmul.mubr.bf16.gmra.mrb[0].mxu0 %v2974
        %v3053 = vpop.f32.mrb[0].mxu0
        %v3054 = vadd.f32 %v2943, %v3053
        %v3055 = vpop.f32.mrb[0].mxu0
        %v3056 = vpop.f32.mrb[0].mxu0
        %v3057 = vadd.f32 %v2943, %v3056
        %v3058 = vpop.f32.mrb[0].mxu0
        %3059 = vmatprep.mubr.bf16.mxu0 0
        %3060 = vmatmul.mubr.bf16.gmra.mrb[0].mxu0 %v2977
        %v3061 = vpop.f32.mrb[0].mxu0
        %v3062 = vadd.f32 %v2943, %v3061
        %v3063 = vpop.f32.mrb[0].mxu0
        %v3064 = vpop.f32.mrb[0].mxu0
        %v3065 = vadd.f32 %v2943, %v3064
        %v3066 = vpop.f32.mrb[0].mxu0
        %3067 = vmatprep.mubr.bf16.mxu0 0
        %3068 = vmatmul.mubr.bf16.gmra.mrb[0].mxu0 %v2980
        %v3069 = vpop.f32.mrb[0].mxu0
        %v3070 = vadd.f32 %v2943, %v3069
        %v3071 = vpop.f32.mrb[0].mxu0
        %v3072 = vpop.f32.mrb[0].mxu0
        %v3073 = vadd.f32 %v2943, %v3072
        %v3074 = vpop.f32.mrb[0].mxu0
        %3075 = vmatprep.mubr.bf16.mxu0 0
        %3076 = vmatmul.mubr.bf16.gmra.mrb[0].mxu0 %v2983
        %v3077 = vpop.f32.mrb[0].mxu0
        %v3078 = vadd.f32 %v2943, %v3077
        %v3079 = vpop.f32.mrb[0].mxu0
        %v3080 = vpop.f32.mrb[0].mxu0
        %v3081 = vadd.f32 %v2943, %v3080
        %v3082 = vpop.f32.mrb[0].mxu0
        %3083 = vmatprep.mubr.bf16.mxu0 0
        %3084 = vmatmul.mubr.bf16.gmra.mrb[0].mxu0 %v2986
        %v3085 = vpop.f32.mrb[0].mxu0
        %v3086 = vadd.f32 %v2943, %v3085
        %v3087 = vpop.f32.mrb[0].mxu0
        %v3088 = vpop.f32.mrb[0].mxu0
        %v3089 = vadd.f32 %v2943, %v3088
        %v3090 = vpop.f32.mrb[0].mxu0
        %3091 = vmatprep.mubr.bf16.mxu0 0
        %3092 = vmatmul.mubr.bf16.gmra.mrb[0].mxu0 %v2989
        %v3093 = vpop.f32.mrb[0].mxu0
        %v3094 = vadd.f32 %v2943, %v3093
        %v3095 = vpop.f32.mrb[0].mxu0
        %v3096 = vpop.f32.mrb[0].mxu0
        %v3097 = vadd.f32 %v2943, %v3096
        %v3098 = vpop.f32.mrb[0].mxu0
        %3099 = vmatprep.mubr.bf16.mxu0 0
        %3100 = vmatmul.mubr.bf16.gmra.mrb[0].mxu0 %v2992
        %v3101 = vpop.f32.mrb[0].mxu0
        %v3102 = vadd.f32 %v2943, %v3101
        %v3103 = vpop.f32.mrb[0].mxu0
        %v3104 = vpop.f32.mrb[0].mxu0
        %v3105 = vadd.f32 %v2943, %v3104
        %v3106 = vpop.f32.mrb[0].mxu0
        %3107 = vmatprep.mubr.bf16.mxu0 0
        %3108 = vmatmul.mubr.bf16.gmra.mrb[0].mxu0 %v2995
        %v3109 = vpop.f32.mrb[0].mxu0
        %v3110 = vadd.f32 %v2943, %v3109
        %v3111 = vpop.f32.mrb[0].mxu0
        %v3112 = vpop.f32.mrb[0].mxu0
        %v3113 = vadd.f32 %v2943, %v3112
        %v3114 = vpop.f32.mrb[0].mxu0
        %3115 = vmatprep.mubr.bf16.mxu0 0
        %3116 = vmatmul.mubr.bf16.gmra.mrb[0].mxu0 %v2998
        %v3117 = vpop.f32.mrb[0].mxu0
        %v3118 = vadd.f32 %v2943, %v3117
        %v3119 = vpop.f32.mrb[0].mxu0
        %v3120 = vpop.f32.mrb[0].mxu0
        %v3121 = vadd.f32 %v2943, %v3120
        %v3122 = vpop.f32.mrb[0].mxu0
        %3123 = vmatprep.mubr.bf16.mxu0 0
        %3124 = vmatmul.mubr.bf16.gmra.mrb[0].mxu0 %v3001
        %v3125 = vpop.f32.mrb[0].mxu0
        %v3126 = vadd.f32 %v2943, %v3125
        %v3127 = vpop.f32.mrb[0].mxu0
        %v3128 = vpop.f32.mrb[0].mxu0
        %v3129 = vadd.f32 %v2943, %v3128
        %v3130 = vpop.f32.mrb[0].mxu0
        %3131 = vmatprep.mubr.bf16.mxu0 0
        %3132 = vmatmul.mubr.bf16.gmra.mrb[0].mxu0 %v3004
        %v3133 = vpop.f32.mrb[0].mxu0
        %v3134 = vadd.f32 %v2943, %v3133
        %v3135 = vpop.f32.mrb[0].mxu0
        %v3136 = vpop.f32.mrb[0].mxu0
        %v3137 = vadd.f32 %v2943, %v3136
        %v3138 = vpop.f32.mrb[0].mxu0
        %3139 = vmatprep.mubr.bf16.mxu0 0
        %3140 = vmatmul.mubr.bf16.gmra.mrb[0].mxu0 %v3007
        %v3141 = vpop.f32.mrb[0].mxu0
        %v3142 = vadd.f32 %v2943, %v3141
        %v3143 = vpop.f32.mrb[0].mxu0
        %v3144 = vpop.f32.mrb[0].mxu0
        %v3145 = vadd.f32 %v2943, %v3144
        %v3146 = vpop.f32.mrb[0].mxu0
        %3147 = vmatprep.mubr.bf16.mxu0 0
        %3148 = vmatmul.mubr.bf16.gmra.mrb[0].mxu0 %v3010
        %v3149 = vpop.f32.mrb[0].mxu0
        %v3150 = vadd.f32 %v2943, %v3149
        %v3151 = vpop.f32.mrb[0].mxu0
        %v3152 = vpop.f32.mrb[0].mxu0
        %v3153 = vadd.f32 %v2943, %v3152
        %v3154 = vpop.f32.mrb[0].mxu0
        %3155 = vmatprep.mubr.bf16.mxu0 0
        %3156 = vmatmul.mubr.bf16.gmra.mrb[0].mxu0 %v3013
        %v3157 = vpop.f32.mrb[0].mxu0
        %v3158 = vadd.f32 %v2943, %v3157
        %v3159 = vpop.f32.mrb[0].mxu0
        %v3160 = vpop.f32.mrb[0].mxu0
        %v3161 = vadd.f32 %v2943, %v3160
        %v3162 = vpop.f32.mrb[0].mxu0
        %3163 = vdwg.mxu0
        %v3164 = vpack.c.bf16 %v3057, %v3054
        %v3165 = vpack.c.bf16 %v3065, %v3062
        %v3166 = vpack.c.bf16 %v3073, %v3070
        %v3167 = vpack.c.bf16 %v3081, %v3078
        %v3168 = vpack.c.bf16 %v3089, %v3086
        %v3169 = vpack.c.bf16 %v3097, %v3094
        %v3170 = vpack.c.bf16 %v3105, %v3102
        %v3171 = vpack.c.bf16 %v3113, %v3110
        %v3172 = vpack.c.bf16 %v3121, %v3118
        %v3173 = vpack.c.bf16 %v3129, %v3126
        %v3174 = vpack.c.bf16 %v3137, %v3134
        %v3175 = vpack.c.bf16 %v3145, %v3142
        %v3176 = vpack.c.bf16 %v3153, %v3150
        %v3177 = vpack.c.bf16 %v3161, %v3158
        %v3192 = vunpack.c.l.b16 %v3164
        %v3193 = vunpack.c.h.b16 %v3164
        %v3194 = vunpack.c.l.b16 %v3165
        %v3195 = vunpack.c.h.b16 %v3165
        %v3196 = vunpack.c.l.b16 %v3166
        %v3197 = vunpack.c.h.b16 %v3166
        %v3198 = vunpack.c.l.b16 %v3167
        %v3199 = vunpack.c.h.b16 %v3167
        %v3200 = vunpack.c.l.b16 %v3168
        %v3201 = vunpack.c.h.b16 %v3168
        %v3202 = vunpack.c.l.b16 %v3169
        %v3203 = vunpack.c.h.b16 %v3169
        %v3204 = vunpack.c.l.b16 %v3170
        %v3205 = vunpack.c.h.b16 %v3170
        %v3206 = vunpack.c.l.b16 %v3171
        %v3207 = vunpack.c.h.b16 %v3171
        %v3208 = vunpack.c.l.b16 %v3172
        %v3209 = vunpack.c.h.b16 %v3172
        %v3210 = vunpack.c.l.b16 %v3173
        %v3211 = vunpack.c.h.b16 %v3173
        %v3212 = vunpack.c.l.b16 %v3174
        %v3213 = vunpack.c.h.b16 %v3174
        %v3214 = vunpack.c.l.b16 %v3175
        %v3215 = vunpack.c.h.b16 %v3175
        %v3216 = vunpack.c.l.b16 %v3176
        %v3217 = vunpack.c.h.b16 %v3176
        %v3218 = vunpack.c.l.b16 %v3177
        %v3219 = vunpack.c.h.b16 %v3177
        %v3220 = vpack.c.b16 %v3192, %v3192
        %v3221 = vpack.c.b16 %v3193, %v3193
        %v3222 = vpack.c.b16 %v3194, %v3194
        %v3223 = vpack.c.b16 %v3195, %v3195
        %v3224 = vpack.c.b16 %v3196, %v3196
        %v3225 = vpack.c.b16 %v3197, %v3197
        %v3226 = vpack.c.b16 %v3198, %v3198
        %v3227 = vpack.c.b16 %v3199, %v3199
        %v3228 = vpack.c.b16 %v3200, %v3200
        %v3229 = vpack.c.b16 %v3201, %v3201
        %v3230 = vpack.c.b16 %v3202, %v3202
        %v3231 = vpack.c.b16 %v3203, %v3203
        %v3232 = vpack.c.b16 %v3204, %v3204
        %v3233 = vpack.c.b16 %v3205, %v3205
        %v3234 = vpack.c.b16 %v3206, %v3206
        %v3235 = vpack.c.b16 %v3207, %v3207
        %v3236 = vpack.c.b16 %v3208, %v3208
        %v3237 = vpack.c.b16 %v3209, %v3209
        %v3238 = vpack.c.b16 %v3210, %v3210
        %v3239 = vpack.c.b16 %v3211, %v3211
        %v3240 = vpack.c.b16 %v3212, %v3212
        %v3241 = vpack.c.b16 %v3213, %v3213
        %v3242 = vpack.c.b16 %v3214, %v3214
        %v3243 = vpack.c.b16 %v3215, %v3215
        %v3244 = vpack.c.b16 %v3216, %v3216
        %v3245 = vpack.c.b16 %v3217, %v3217
        %v3246 = vpack.c.b16 %v3218, %v3218
        %v3247 = vpack.c.b16 %v3219, %v3219
        %3276 = vst [vmem:[%s177] sm:$0xf] %v3220
        %3277 = vst [vmem:[%s177 + $0x4] sm:$0xf] %v3221
        %3278 = vst [vmem:[%s177 + $0x8] sm:$0xf] %v3222
        %3279 = vst [vmem:[%s177 + $0xc] sm:$0xf] %v3223
        %3280 = vst [vmem:[%s177 + $0x10] sm:$0xf] %v3224
        %3281 = vst [vmem:[%s177 + $0x14] sm:$0xf] %v3225
        %3282 = vst [vmem:[%s177 + $0x18] sm:$0xf] %v3226
        %3283 = vst [vmem:[%s177 + $0x1c] sm:$0xf] %v3227
        %3284 = vst [vmem:[%s177 + $0x20] sm:$0xf] %v3228
        %3285 = vst [vmem:[%s177 + $0x24] sm:$0xf] %v3229
        %3286 = vst [vmem:[%s177 + $0x28] sm:$0xf] %v3230
        %3287 = vst [vmem:[%s177 + $0x2c] sm:$0xf] %v3231
        %3288 = vst [vmem:[%s177 + $0x30] sm:$0xf] %v3232
        %3289 = vst [vmem:[%s177 + $0x34] sm:$0xf] %v3233
        %3290 = vst [vmem:[%s177 + $0x38] sm:$0xf] %v3234
        %3291 = vst [vmem:[%s177 + $0x3c] sm:$0xf] %v3235
        %3292 = vst [vmem:[%s177 + $0x40] sm:$0xf] %v3236
        %3293 = vst [vmem:[%s177 + $0x44] sm:$0xf] %v3237
        %3294 = vst [vmem:[%s177 + $0x48] sm:$0xf] %v3238
        %3295 = vst [vmem:[%s177 + $0x4c] sm:$0xf] %v3239
        %3296 = vst [vmem:[%s177 + $0x50] sm:$0xf] %v3240
        %3297 = vst [vmem:[%s177 + $0x54] sm:$0xf] %v3241
        %3298 = vst [vmem:[%s177 + $0x58] sm:$0xf] %v3242
        %3299 = vst [vmem:[%s177 + $0x5c] sm:$0xf] %v3243
        %3300 = vst [vmem:[%s177 + $0x60] sm:$0xf] %v3244
        %3301 = vst [vmem:[%s177 + $0x64] sm:$0xf] %v3245
        %3302 = vst [vmem:[%s177 + $0x68] sm:$0xf] %v3246
        %3303 = vst [vmem:[%s177 + $0x6c] sm:$0xf] %v3247
        %s3304 = sand.u32 %s107, 1
        %s3305 = scalar_lea.sflag [#allocation4], %s3304
        %s3306 = sand.u32 %s107, 1
        %s3307 = smul.addr %s3306, 112
        %s3308 = scalar_lea.vmem [#allocation3], %s3307
        // Predicated region
        $region33: #{tpu_custom_call.1} parent=31 // pred_check
          %p3309 = pneg %p117
        $region34: #{tpu_custom_call.1} parent=31 // pred_check_branch
          %3311 = sbr.rel (%p3309) target = $region36
        $region35: #{tpu_custom_call.1} parent=31 // pred_region
          %s3312 = sadd.s32 %s21, %s22
          %s3313 = smul.u32 28, %s3312
          %s3315 = ssub.s32 1792, 1792
          %3316 = vsyncadd %s3305, %s3315
          %s3317 = smul.addr %s3313, 64
          %s3318 = scalar_lea.hbm %s3, %s3317
          %s3319 = sshll.u32 %s3308, 4
          %s3320 = int_to_ptr.vmem [resolvable:$true] %s3319
          %3325 = dma.vmem_to_hbm [thread:$0]  %s3320, 1792, %s3318, %s3305, 64, 64, 4
        $region36: #{tpu_custom_call.1} parent=31 // pred_fallthru
          _
      $region32: #{tpu_custom_call.1} parent=5 // pred_fallthru
        _
      %p3326 = scmp.le.s32.totalorder 2, %s12
      // Predicated region
      $region37: #{tpu_custom_call.1} parent=5 // pred_check
        %p3327 = pneg %p3326
      $region38: #{tpu_custom_call.1} parent=5 // pred_check_branch
        %3329 = sbr.rel (%p3327) target = $region40
      $region39: #{tpu_custom_call.1} parent=5 // pred_region
        %s3330 = ssub.s32 %s12, 2
        // Predicated region
        $region41: #{tpu_custom_call.1} parent=39 // pred_check
          %p3331 = pneg %p123
        $region42: #{tpu_custom_call.1} parent=39 // pred_check_branch
          %3333 = sbr.rel (%p3331) target = $region44
        $region43: #{tpu_custom_call.1} parent=39 // pred_region
          %s3334 = sand.u32 %s108, 1
          %s3335 = scalar_lea.sflag [#allocation4], %s3334
          %s3336 = sand.u32 %s108, 1
          %s3337 = smul.addr %s3336, 112
          %s3338 = scalar_lea.vmem [#allocation3], %s3337
          %3339 = dma.done %s3335, 1792
        $region44: #{tpu_custom_call.1} parent=39 // pred_fallthru
          _
      $region40: #{tpu_custom_call.1} parent=5 // pred_fallthru
        _
    $region6: #{tpu_custom_call.1} parent=1 // loop_footer
      %s16 = sadd.s32 1, %s12
    $region7: #{tpu_custom_call.1} parent=1 // loop_footer_branch
      %11 = sbr.rel target = $region3
    $region8: #{tpu_custom_call.1} parent=1 // loop_exit
      _
    %3340 = vsyncpa [#allocation4], 1
    %s3341 = scalar_lea.sflag [#allocation4], 1
    %3342 = vsyncpa %s3341, 1

</llo_original>
